<compile_context>
chip_gen: v6e
topology: v6e:2x2x1
jax: 0.10.0
libtpu: 0.0.40
codegen_flags: <defaults>
</compile_context>

<pallas_src>
import functools

import jax
import jax.numpy as jnp
from jax import lax
from jax.experimental import pallas as pl
from jax.experimental.pallas import tpu as pltpu

EPS = 1e-5          # nn.BatchNorm2d default
LANES = 128


def _round_up(x, m):
    return (x + m - 1) // m * m


def _cdiv(a, b):
    return (a + b - 1) // b


def _vmem_budget():
    """(per-step working-set budget, scoped-vmem limit) — generation aware."""
    phys = None
    try:
        phys = getattr(pltpu.get_tpu_info(), "vmem_capacity_bytes", None)
    except Exception:
        phys = None
    if phys is not None and phys >= 100 * 1024 * 1024:        # v5e / v6e: 128 MiB VMEM
        return 48 * 1024 * 1024, 64 * 1024 * 1024
    return 32 * 1024 * 1024, 48 * 1024 * 1024                 # v7x (64 MiB) / unknown


def _pick_tile_hw(hw, k, cout_pad, budget, n_images):
    """Largest HW tile (multiple of 128 lanes) whose double-buffered working set fits."""
    cap = max(LANES, _round_up(hw, LANES))
    tile = LANES
    for t in (2048, 1024, 512, 256, 128):
        if t > cap:
            continue
        k1 = 2 * t * k * 2 + 2 * t * cout_pad * 2 + k * cout_pad * 2   # patches + y + w
        k2 = 2 * t * cout_pad * 2 + 2 * t * cout_pad * 4               # y in + f32 out
        if max(k1, k2) <= budget:
            tile = t
            break
    # Keep >= 2 grid steps so the "parallel" grid can feed both v7x TensorCores.
    while n_images * _cdiv(hw, tile) < 2 and tile > LANES:
        tile //= 2
    return tile


def _maybe_single_buffered(block_shape, index_map, nbytes):
    """Resident (constant index_map) operand: single-buffer it when it is big enough
    that the wasted second pipeline buffer matters (most valuable under v7x's VMEM)."""
    if nbytes >= (1 << 20):
        try:
            return pl.BlockSpec(block_shape, index_map, pipeline_mode=pl.Buffered(1))
        except TypeError:           # older jax without pipeline_mode support
            pass
    return pl.BlockSpec(block_shape, index_map)


# --------------------------------------------------------------------------
# Kernel 1: conv-as-matmul tile + partial (centered) BatchNorm statistics
# --------------------------------------------------------------------------
def _conv_stats_kernel(patches_ref, w_ref, y_ref, psum_ref, pm2_ref, *, hw, tile_hw):
    # patches_ref: [tile_hw, K]        bf16
    # w_ref:       [K, Cout_pad]       bf16 (resident)
    # y_ref:       [tile_hw, Cout_pad] bf16 conv activations
    # psum_ref:    [1, Cout_pad]       f32  per-tile channel sum
    # pm2_ref:     [1, Cout_pad]       f32  per-tile centered sum of squares
    j = pl.program_id(1)
    acc = jnp.dot(patches_ref[...], w_ref[...], preferred_element_type=jnp.float32)
    y_ref[...] = acc.astype(y_ref.dtype)

    # BN partial statistics from the f32 accumulator (before the bf16 cast).
    # Rows beyond `valid` are zero-padded patches: they add nothing to the sum and
    # are masked out of the centered second moment so the Chan merge stays exact.
    valid = jnp.minimum(tile_hw, hw - j * tile_hw)
    s = jnp.sum(acc, axis=0, keepdims=True)
    mu = s / valid.astype(jnp.float32)
    rows = lax.broadcasted_iota(jnp.int32, (tile_hw, 1), 0)
    centered = jnp.where(rows < valid, acc - mu, 0.0)
    psum_ref[...] = s
    pm2_ref[...] = jnp.sum(centered * centered, axis=0, keepdims=True)


# --------------------------------------------------------------------------
# Kernel 2: folded BatchNorm (single FMA) + PReLU + transpose to NCHW layout
# --------------------------------------------------------------------------
def _bn_prelu_kernel(y_ref, scale_ref, shift_ref, alpha_ref, o_ref):
    # y_ref:       [tile_hw, Cout_pad]  bf16
    # scale/shift: [1, Cout_pad]        f32 (resident)
    # alpha_ref:   [1, 1]               f32 in SMEM (shared PReLU slope)
    # o_ref:       [Cout_pad, tile_hw]  f32 (transposed -> NCHW-friendly layout)
    y_bn = y_ref[...].astype(jnp.float32) * scale_ref[...] + shift_ref[...]
    alpha = alpha_ref[0, 0]
    act = jnp.where(y_bn >= 0.0, y_bn, alpha * y_bn)
    o_ref[...] = jnp.transpose(act)     # XLU transpose; ~free under a mem-bound kernel


# --------------------------------------------------------------------------
# Wrapper
# --------------------------------------------------------------------------
def _im2col_bf16(x_nchw, stride):
    """NCHW -> per-image [N, Ho*Wo, 9*Cin] bf16 patches for a 3x3 / pad=1 conv."""
    n, cin, h, w = x_nchw.shape
    ho = (h + 2 - 3) // stride + 1
    wo = (w + 2 - 3) // stride + 1
    x = jnp.transpose(x_nchw, (0, 2, 3, 1)).astype(jnp.bfloat16)      # NHWC, bf16
    xp = jnp.pad(x, ((0, 0), (1, 1), (1, 1), (0, 0)))
    cols = []
    for kh in range(3):
        for kw in range(3):
            cols.append(xp[:, kh:kh + (ho - 1) * stride + 1:stride,
                              kw:kw + (wo - 1) * stride + 1:stride, :])
    patches = jnp.stack(cols, axis=3).reshape(n, ho * wo, 9 * cin)
    return patches, ho, wo


def discriminator_block(x_nchw, conv_w, bn_gamma, bn_beta, prelu_alpha, stride,
                        *, tile_hw=None):
    """conv_w: [Cout, Cin, 3, 3] (PyTorch layout); bn_gamma/beta: [Cout];
    prelu_alpha: scalar (nn.PReLU() shared slope).  Returns NCHW output."""
    cout, cin, _, _ = conv_w.shape
    n = x_nchw.shape[0]
    patches, ho, wo = _im2col_bf16(x_nchw, stride)
    hw = ho * wo
    k = 9 * cin
    cout_pad = _round_up(cout, LANES)

    budget, vmem_limit = _vmem_budget()
    if tile_hw is None:
        tile_hw = _pick_tile_hw(hw, k, cout_pad, budget, n)
    else:
        tile_hw = _round_up(tile_hw, LANES)
    hw_pad = _round_up(hw, tile_hw)
    n_hw_tiles = hw_pad // tile_hw

    # Zero rows (per-image HW padding) contribute nothing to the BN statistics and
    # are sliced off at the end; zero lanes (Cout padding) keep stores lane-dense.
    patches_p = jnp.pad(patches, ((0, 0), (0, hw_pad - hw), (0, 0)))            # bf16
    # [Cout, Cin, 3, 3] -> [3, 3, Cin, Cout] -> [9*Cin, Cout] (matches patch ordering)
    w_mat = jnp.transpose(conv_w, (2, 3, 1, 0)).reshape(k, cout)
    w_p = jnp.pad(w_mat, ((0, 0), (0, cout_pad - cout))).astype(jnp.bfloat16)

    cost1 = pl.CostEstimate(
        flops=2 * n * hw_pad * k * cout_pad, transcendentals=0,
        bytes_accessed=n * hw_pad * k * 2 + k * cout_pad * 2
        + n * hw_pad * cout_pad * 2 + 2 * n * n_hw_tiles * cout_pad * 4)

    y, psum, pm2 = pl.pallas_call(
        functools.partial(_conv_stats_kernel, hw=hw, tile_hw=tile_hw),
        out_shape=(
            jax.ShapeDtypeStruct((n, hw_pad, cout_pad), jnp.bfloat16),
            jax.ShapeDtypeStruct((n * n_hw_tiles, 1, cout_pad), jnp.float32),
            jax.ShapeDtypeStruct((n * n_hw_tiles, 1, cout_pad), jnp.float32),
        ),
        grid=(n, n_hw_tiles),
        in_specs=[
            pl.BlockSpec((None, tile_hw, k), lambda i, j: (i, j, 0)),
            _maybe_single_buffered((k, cout_pad), lambda i, j: (0, 0),
                                   k * cout_pad * 2),
        ],
        out_specs=(
            pl.BlockSpec((None, tile_hw, cout_pad), lambda i, j: (i, j, 0)),
            pl.BlockSpec((None, 1, cout_pad), lambda i, j: (i * n_hw_tiles + j, 0, 0)),
            pl.BlockSpec((None, 1, cout_pad), lambda i, j: (i * n_hw_tiles + j, 0, 0)),
        ),
        compiler_params=pltpu.CompilerParams(
            dimension_semantics=("parallel", "parallel"),
            vmem_limit_bytes=vmem_limit),
        cost_estimate=cost1,
    )(patches_p, w_p)

    # ---- exact global BN statistics (Chan merge of per-tile centered moments) ----
    counts = jnp.minimum(tile_hw, hw - jnp.arange(n_hw_tiles) * tile_hw)
    counts = jnp.tile(counts, n).astype(jnp.float32)[:, None]            # [n*T, 1]
    total_n = jnp.float32(n * hw)
    sums = psum[:, 0, :]                                                 # [n*T, C]
    mean = jnp.sum(sums, axis=0) / total_n                               # [C]
    mu_t = sums / counts
    m2 = jnp.sum(pm2[:, 0, :], axis=0) \
        + jnp.sum(counts * jnp.square(mu_t - mean[None, :]), axis=0)
    var = jnp.maximum(m2 / total_n, 0.0)          # biased var (torch train-mode norm)
    inv_std = lax.rsqrt(var + EPS)

    gamma_p = jnp.pad(bn_gamma.astype(jnp.float32), (0, cout_pad - cout))
    beta_p = jnp.pad(bn_beta.astype(jnp.float32), (0, cout_pad - cout))
    scale = (gamma_p * inv_std).reshape(1, cout_pad)
    shift = (beta_p - mean * gamma_p * inv_std).reshape(1, cout_pad)
    alpha = jnp.asarray(prelu_alpha, jnp.float32).reshape(1, 1)

    cost2 = pl.CostEstimate(
        flops=4 * n * hw_pad * cout_pad, transcendentals=0,
        bytes_accessed=n * hw_pad * cout_pad * (2 + 4) + 2 * cout_pad * 4)

    out_t = pl.pallas_call(
        _bn_prelu_kernel,
        out_shape=jax.ShapeDtypeStruct((n, cout_pad, hw_pad), jnp.float32),
        grid=(n, n_hw_tiles),
        in_specs=[
            pl.BlockSpec((None, tile_hw, cout_pad), lambda i, j: (i, j, 0)),
            pl.BlockSpec((1, cout_pad), lambda i, j: (0, 0)),     # resident, tiny
            pl.BlockSpec((1, cout_pad), lambda i, j: (0, 0)),     # resident, tiny
            pl.BlockSpec(memory_space=pltpu.MemorySpace.SMEM),
        ],
        out_specs=pl.BlockSpec((None, cout_pad, tile_hw), lambda i, j: (i, 0, j)),
        compiler_params=pltpu.CompilerParams(
            dimension_semantics=("parallel", "parallel"),
            vmem_limit_bytes=vmem_limit),
        cost_estimate=cost2,
    )(y, scale, shift, alpha)

    # NCHW result; the slice is a no-op when Cout / HW are already tile-aligned.
    # TODO(synk): input_output_aliases / fusing this FMA+select into the consumer
    #             would drop kernel 2's HBM round-trip entirely; aliasing is not
    #             possible here because y (bf16, [N,HW,C]) and the output
    #             (f32, [N,C,HW]) differ in dtype and layout.
    return out_t[:, :cout, :hw].reshape(n, cout, ho, wo)


# --------------------------------------------------------------------------
# Pure-XLA reference (conv on bf16-rounded operands, matching the kernel's MXU
# precision) -> train-mode BN (biased batch var) -> PReLU, all in f32.
# --------------------------------------------------------------------------
def _reference_block(x, conv_w, gamma, beta, alpha, stride):
    xb = x.astype(jnp.bfloat16).astype(jnp.float32)
    wb = conv_w.astype(jnp.bfloat16).astype(jnp.float32)
    y = lax.conv_general_dilated(
        xb, wb, window_strides=(stride, stride), padding=((1, 1), (1, 1)),
        dimension_numbers=("NCHW", "OIHW", "NCHW"))
    mean = jnp.mean(y, axis=(0, 2, 3), keepdims=True)
    var = jnp.var(y, axis=(0, 2, 3), keepdims=True)       # biased, like torch training
    y_bn = (y - mean) * lax.rsqrt(var + EPS)
    y_bn = y_bn * gamma.reshape(1, -1, 1, 1) + beta.reshape(1, -1, 1, 1)
    return jnp.where(y_bn >= 0.0, y_bn, alpha * y_bn)


if __name__ == "__main__":
    key = jax.random.PRNGKey(0)
    k_x, k_w, k_g, k_b = jax.random.split(key, 4)

    N, CIN, H, W = 2, 4, 16, 16
    COUT = 8

    x = jax.random.normal(k_x, (N, CIN, H, W), dtype=jnp.float32)
    conv_w = jax.random.normal(k_w, (COUT, CIN, 3, 3), dtype=jnp.float32) * 0.1
    bn_gamma = 1.0 + 0.1 * jax.random.normal(k_g, (COUT,), dtype=jnp.float32)
    bn_beta = 0.1 * jax.random.normal(k_b, (COUT,), dtype=jnp.float32)
    prelu_alpha = jnp.float32(0.25)        # nn.PReLU() default init

    block = jax.jit(discriminator_block, static_argnames=("stride", "tile_hw"))

    # stride=1: tile_hw=128 -> 2x2 grid, exercises multi-tile stats + the pipeline.
    out1 = jax.block_until_ready(
        block(x, conv_w, bn_gamma, bn_beta, prelu_alpha, stride=1, tile_hw=128))
    assert out1.shape == (N, COUT, H, W), out1.shape
    assert bool(jnp.isfinite(out1).all())
    ref1 = _reference_block(x, conv_w, bn_gamma, bn_beta, prelu_alpha, 1)
    assert bool(jnp.allclose(out1, ref1, atol=5e-2, rtol=5e-2)), \
        float(jnp.max(jnp.abs(out1 - ref1)))

    # stride=2: spatial downsample; HW=64 < 128 exercises the masked-stats path.
    out2 = jax.block_until_ready(
        block(x, conv_w, bn_gamma, bn_beta, prelu_alpha, stride=2))
    assert out2.shape == (N, COUT, H // 2, W // 2), out2.shape
    assert bool(jnp.isfinite(out2).all())
    ref2 = _reference_block(x, conv_w, bn_gamma, bn_beta, prelu_alpha, 2)
    assert bool(jnp.allclose(out2, ref2, atol=5e-2, rtol=5e-2)), \
        float(jnp.max(jnp.abs(out2 - ref2)))

    print("KERNEL_OK")
</pallas_src>

<mosaic_0001>
module attributes {stable_mosaic.version = 11 : i64} {
  func.func @_conv_stats_kernel(%arg0: i32, %arg1: i32, %arg2: memref<1x128x36xbf16, #tpu.memory_space<vmem>>, %arg3: memref<36x128xbf16, #tpu.memory_space<vmem>>, %arg4: memref<1x128x128xbf16, #tpu.memory_space<vmem>>, %arg5: memref<1x1x128xf32, #tpu.memory_space<vmem>>, %arg6: memref<1x1x128xf32, #tpu.memory_space<vmem>>) attributes {dimension_semantics = [#tpu.dimension_semantics<parallel>, #tpu.dimension_semantics<parallel>], iteration_bounds = array<i64: 2, 2>, scalar_prefetch = 0 : i64, scratch_operands = 0 : i64, tpu.core_type = #tpu.core_type<tc>, window_params = [{transform_indices = @transform_0, window_bounds = array<i64: 1, 128, 36>}, {pipeline_mode = #tpu.pipeline_mode<synchronous>, transform_indices = @transform_1, window_bounds = array<i64: 36, 128>}, {transform_indices = @transform_2, window_bounds = array<i64: 1, 128, 128>}, {transform_indices = @transform_3, window_bounds = array<i64: 1, 1, 128>}, {transform_indices = @transform_4, window_bounds = array<i64: 1, 1, 128>}]} {
    %c0 = arith.constant 0 : index
    %c0_0 = arith.constant 0 : index
    %c0_1 = arith.constant 0 : index
    %0 = vector.load %arg2[%c0, %c0_0, %c0_1] : memref<1x128x36xbf16, #tpu.memory_space<vmem>>, vector<1x128x36xbf16>
    %1 = vector.shape_cast %0 : vector<1x128x36xbf16> to vector<128x36xbf16>
    %c0_2 = arith.constant 0 : index
    %c0_3 = arith.constant 0 : index
    %2 = vector.load %arg3[%c0_2, %c0_3] : memref<36x128xbf16, #tpu.memory_space<vmem>>, vector<36x128xbf16>
    %cst = arith.constant dense<0.000000e+00> : vector<128x128xf32>
    %3 = tpu.matmul %1, %2, %cst {dimension_numbers = #tpu.dot_dimension_numbers<[1], [0], [0], [1], [0, 0, 1, 1], [], []>} : vector<128x36xbf16>, vector<36x128xbf16>, vector<128x128xf32> -> vector<128x128xf32>
    %4 = arith.truncf %3 : vector<128x128xf32> to vector<128x128xbf16>
    %c0_4 = arith.constant 0 : index
    %c0_5 = arith.constant 0 : index
    %c0_6 = arith.constant 0 : index
    %5 = vector.load %arg4[%c0_4, %c0_5, %c0_6] : memref<1x128x128xbf16, #tpu.memory_space<vmem>>, vector<1x128x128xbf16>
    %6 = vector.shape_cast %5 : vector<1x128x128xbf16> to vector<128x128xbf16>
    %7 = vector.shape_cast %4 : vector<128x128xbf16> to vector<1x128x128xbf16>
    tpu.vector_store %arg4[%c0_4, %c0_5, %c0_6], %7 {strides = array<i32>} : memref<1x128x128xbf16, #tpu.memory_space<vmem>>, vector<1x128x128xbf16>,
    %c128_i32 = arith.constant 128 : i32
    %8 = arith.muli %arg1, %c128_i32 : i32
    %c256_i32 = arith.constant 256 : i32
    %9 = arith.subi %c256_i32, %8 : i32
    %c128_i32_7 = arith.constant 128 : i32
    %10 = arith.minsi %c128_i32_7, %9 : i32
    %cst_8 = arith.constant dense<0.000000e+00> : vector<128xf32>
    %11 = vector.multi_reduction <add>, %3, %cst_8 [0] : vector<128x128xf32> to vector<128xf32>
    %12 = vector.shape_cast %11 : vector<128xf32> to vector<1x128xf32>
    %13 = arith.sitofp %10 : i32 to f32
    %14 = vector.broadcast %13 : f32 to vector<1x128xf32>
    %15 = arith.divf %12, %14 : vector<1x128xf32>
    %16 = tpu.iota {dimensions = array<i32: 0>} : vector<128x1xi32>
    %17 = vector.broadcast %10 : i32 to vector<128x1xi32>
    %18 = arith.cmpi slt, %16, %17 : vector<128x1xi32>
    %19 = vector.broadcast %15 : vector<1x128xf32> to vector<128x128xf32>
    %20 = arith.subf %3, %19 : vector<128x128xf32>
    %cst_9 = arith.constant 0.000000e+00 : f32
    %21 = vector.shape_cast %18 : vector<128x1xi1> to vector<128x1xi1>
    %22 = vector.broadcast %21 : vector<128x1xi1> to vector<128x128xi1>
    %23 = vector.broadcast %cst_9 : f32 to vector<128x128xf32>
    %24 = arith.select %22, %20, %23 : vector<128x128xi1>, vector<128x128xf32>
    %c0_10 = arith.constant 0 : index
    %c0_11 = arith.constant 0 : index
    %c0_12 = arith.constant 0 : index
    %25 = vector.load %arg5[%c0_10, %c0_11, %c0_12] : memref<1x1x128xf32, #tpu.memory_space<vmem>>, vector<1x1x128xf32>
    %26 = vector.shape_cast %25 : vector<1x1x128xf32> to vector<1x128xf32>
    %27 = vector.shape_cast %12 : vector<1x128xf32> to vector<1x1x128xf32>
    tpu.vector_store %arg5[%c0_10, %c0_11, %c0_12], %27 {strides = array<i32>} : memref<1x1x128xf32, #tpu.memory_space<vmem>>, vector<1x1x128xf32>,
    %28 = arith.mulf %24, %24 : vector<128x128xf32>
    %cst_13 = arith.constant dense<0.000000e+00> : vector<128xf32>
    %29 = vector.multi_reduction <add>, %28, %cst_13 [0] : vector<128x128xf32> to vector<128xf32>
    %30 = vector.shape_cast %29 : vector<128xf32> to vector<1x128xf32>
    %c0_14 = arith.constant 0 : index
    %c0_15 = arith.constant 0 : index
    %c0_16 = arith.constant 0 : index
    %31 = vector.load %arg6[%c0_14, %c0_15, %c0_16] : memref<1x1x128xf32, #tpu.memory_space<vmem>>, vector<1x1x128xf32>
    %32 = vector.shape_cast %31 : vector<1x1x128xf32> to vector<1x128xf32>
    %33 = vector.shape_cast %30 : vector<1x128xf32> to vector<1x1x128xf32>
    tpu.vector_store %arg6[%c0_14, %c0_15, %c0_16], %33 {strides = array<i32>} : memref<1x1x128xf32, #tpu.memory_space<vmem>>, vector<1x1x128xf32>,
    return
  }
  func.func @transform_0(%arg0: i32, %arg1: i32) -> (i32, i32, i32) {
    %c0_i32 = arith.constant 0 : i32
    %c0_i32_0 = arith.constant 0 : i32
    return %arg0, %arg1, %c0_i32 : i32, i32, i32
  }
  func.func @transform_1(%arg0: i32, %arg1: i32) -> (i32, i32) {
    %c0_i32 = arith.constant 0 : i32
    %c0_i32_0 = arith.constant 0 : i32
    %c0_i32_1 = arith.constant 0 : i32
    return %c0_i32, %c0_i32_0 : i32, i32
  }
  func.func @transform_2(%arg0: i32, %arg1: i32) -> (i32, i32, i32) {
    %c0_i32 = arith.constant 0 : i32
    %c0_i32_0 = arith.constant 0 : i32
    return %arg0, %arg1, %c0_i32 : i32, i32, i32
  }
  func.func @transform_3(%arg0: i32, %arg1: i32) -> (i32, i32, i32) {
    %c2_i32 = arith.constant 2 : i32
    %0 = arith.muli %arg0, %c2_i32 : i32
    %1 = arith.addi %0, %arg1 : i32
    %c0_i32 = arith.constant 0 : i32
    %c0_i32_0 = arith.constant 0 : i32
    %c0_i32_1 = arith.constant 0 : i32
    return %1, %c0_i32, %c0_i32_0 : i32, i32, i32
  }
  func.func @transform_4(%arg0: i32, %arg1: i32) -> (i32, i32, i32) {
    %c2_i32 = arith.constant 2 : i32
    %0 = arith.muli %arg0, %c2_i32 : i32
    %1 = arith.addi %0, %arg1 : i32
    %c0_i32 = arith.constant 0 : i32
    %c0_i32_0 = arith.constant 0 : i32
    %c0_i32_1 = arith.constant 0 : i32
    return %1, %c0_i32, %c0_i32_0 : i32, i32, i32
  }
}

module attributes {stable_mosaic.version = 11 : i64} {
  func.func @_bn_prelu_kernel(%arg0: i32, %arg1: i32, %arg2: memref<1x128x128xbf16, #tpu.memory_space<vmem>>, %arg3: memref<1x128xf32, #tpu.memory_space<vmem>>, %arg4: memref<1x128xf32, #tpu.memory_space<vmem>>, %arg5: memref<1x1xf32, #tpu.memory_space<smem>>, %arg6: memref<1x128x128xf32, #tpu.memory_space<vmem>>) attributes {dimension_semantics = [#tpu.dimension_semantics<parallel>, #tpu.dimension_semantics<parallel>], iteration_bounds = array<i64: 2, 2>, scalar_prefetch = 0 : i64, scratch_operands = 0 : i64, tpu.core_type = #tpu.core_type<tc>, window_params = [{transform_indices = @transform_0, window_bounds = array<i64: 1, 128, 128>}, {pipeline_mode = #tpu.pipeline_mode<synchronous>, transform_indices = @transform_1, window_bounds = array<i64: 1, 128>}, {pipeline_mode = #tpu.pipeline_mode<synchronous>, transform_indices = @transform_2, window_bounds = array<i64: 1, 128>}, {transform_indices = @transform_3, window_bounds = array<i64: 1, 1>}, {transform_indices = @transform_4, window_bounds = array<i64: 1, 128, 128>}]} {
    %c0 = arith.constant 0 : index
    %c0_0 = arith.constant 0 : index
    %c0_1 = arith.constant 0 : index
    %0 = vector.load %arg2[%c0, %c0_0, %c0_1] : memref<1x128x128xbf16, #tpu.memory_space<vmem>>, vector<1x128x128xbf16>
    %1 = vector.shape_cast %0 : vector<1x128x128xbf16> to vector<128x128xbf16>
    %2 = arith.extf %1 : vector<128x128xbf16> to vector<128x128xf32>
    %c0_2 = arith.constant 0 : index
    %c0_3 = arith.constant 0 : index
    %3 = vector.load %arg3[%c0_2, %c0_3] : memref<1x128xf32, #tpu.memory_space<vmem>>, vector<1x128xf32>
    %4 = vector.broadcast %3 : vector<1x128xf32> to vector<128x128xf32>
    %5 = arith.mulf %2, %4 : vector<128x128xf32>
    %c0_4 = arith.constant 0 : index
    %c0_5 = arith.constant 0 : index
    %6 = vector.load %arg4[%c0_4, %c0_5] : memref<1x128xf32, #tpu.memory_space<vmem>>, vector<1x128xf32>
    %7 = vector.broadcast %6 : vector<1x128xf32> to vector<128x128xf32>
    %8 = arith.addf %5, %7 : vector<128x128xf32>
    %c0_6 = arith.constant 0 : index
    %c0_7 = arith.constant 0 : index
    %9 = memref.load %arg5[%c0_6, %c0_7] : memref<1x1xf32, #tpu.memory_space<smem>>
    %cst = arith.constant 0.000000e+00 : f32
    %10 = vector.broadcast %cst : f32 to vector<128x128xf32>
    %11 = arith.cmpf oge, %8, %10 : vector<128x128xf32>
    %12 = vector.broadcast %9 : f32 to vector<128x128xf32>
    %13 = arith.mulf %12, %8 : vector<128x128xf32>
    %14 = arith.select %11, %8, %13 : vector<128x128xi1>, vector<128x128xf32>
    %15 = tpu.transpose %14, [1, 0] : vector<128x128xf32> -> vector<128x128xf32>
    %c0_8 = arith.constant 0 : index
    %c0_9 = arith.constant 0 : index
    %c0_10 = arith.constant 0 : index
    %16 = vector.load %arg6[%c0_8, %c0_9, %c0_10] : memref<1x128x128xf32, #tpu.memory_space<vmem>>, vector<1x128x128xf32>
    %17 = vector.shape_cast %16 : vector<1x128x128xf32> to vector<128x128xf32>
    %18 = vector.shape_cast %15 : vector<128x128xf32> to vector<1x128x128xf32>
    tpu.vector_store %arg6[%c0_8, %c0_9, %c0_10], %18 {strides = array<i32>} : memref<1x128x128xf32, #tpu.memory_space<vmem>>, vector<1x128x128xf32>,
    return
  }
  func.func @transform_0(%arg0: i32, %arg1: i32) -> (i32, i32, i32) {
    %c0_i32 = arith.constant 0 : i32
    %c0_i32_0 = arith.constant 0 : i32
    return %arg0, %arg1, %c0_i32 : i32, i32, i32
  }
  func.func @transform_1(%arg0: i32, %arg1: i32) -> (i32, i32) {
    %c0_i32 = arith.constant 0 : i32
    %c0_i32_0 = arith.constant 0 : i32
    %c0_i32_1 = arith.constant 0 : i32
    return %c0_i32, %c0_i32_0 : i32, i32
  }
  func.func @transform_2(%arg0: i32, %arg1: i32) -> (i32, i32) {
    %c0_i32 = arith.constant 0 : i32
    %c0_i32_0 = arith.constant 0 : i32
    %c0_i32_1 = arith.constant 0 : i32
    return %c0_i32, %c0_i32_0 : i32, i32
  }
  func.func @transform_3(%arg0: i32, %arg1: i32) -> (i32, i32) {
    %c0_i32 = arith.constant 0 : i32
    %c0_i32_0 = arith.constant 0 : i32
    %c0_i32_1 = arith.constant 0 : i32
    return %c0_i32, %c0_i32_0 : i32, i32
  }
  func.func @transform_4(%arg0: i32, %arg1: i32) -> (i32, i32, i32) {
    %c0_i32 = arith.constant 0 : i32
    %c0_i32_0 = arith.constant 0 : i32
    return %arg0, %c0_i32, %arg1 : i32, i32, i32
  }
}

</mosaic_0001>

<llo_original>
// kernel: discriminator_block.3
$region0: #{discriminator_block.3}
  #allocation0 [shape = 'u32[]', space=smem, size = 0x4, offset = 0x4, fixed_abs, tag = 'smem constant byte address 0x4 - core index']
  #allocation1 [shape = 'u32[144,128]{1,0:T(1,128)}', space=vmem, size = 0x12000, scoped, tag = 'internal scratch']
  #allocation2 [shape = 'f32[1,1]{1,0:T(1,128)S(6)}', space=smem, size = 0x200, scoped, tag = 'scoped memory for discriminator_block.3']
  %s0 = inlined_call_operand.vmem [shape: bf16[2,256,128], index: 0, kind: input, shape index: {}]
  %s1 = inlined_call_operand.vmem [shape: f32[1,128], index: 1, kind: input, shape index: {}]
  %s2 = inlined_call_operand.vmem [shape: f32[1,128], index: 2, kind: input, shape index: {}]
  %s3 = inlined_call_operand.<no memory space> [shape: f32[1,1], index: 3, kind: input, shape index: {}]
  %s4 = inlined_call_operand.vmem [shape: f32[2,128,256], index: 4, kind: output, shape index: {}]
  %s5 = sld [smem:[#allocation0]]
  $region83: #{discriminator_block.3} parent=0
    _
  %s7 = ssub.s32 1, %s5
  %s8 = scalar_select 0, %s7, %s5
  %9 = sst [smem:[#allocation2]] %s3
  $region1: #{discriminator_block.3} parent=0
    #allocation3 [shape = 'u8[131072]{0}', space=vmem, size = 0x20000, scoped, tag = 'output window, operand 0']
    loop: start=0, step=1, limit=6
    $region2: #{discriminator_block.3} parent=1 // loop_pre_header
      _
    $region3: #{discriminator_block.3} parent=1 // loop_header
      %s11 = sphi 0, %s15
      %p12 = scmp.ge.s32.totalorder %s11, 6
      %s18 = sphi 0, %s30
      %s19 = sphi 0, %s26
      %s20 = sphi 0, %s18
      %s21 = sphi 0, %s19
      %s22 = sphi 0, %s20
      %s23 = sphi 0, %s21
      %s35 = sphi 0, %s37
      %s38 = sphi 0, %s35
      %s39 = sphi 0, %s38
      %s55 = sphi 0, %s39
      %s59 = sphi 0, %s59
      %s61 = sphi 0, %s59
      %s62 = sphi 0, %s61
      %s76 = sphi 0, %s62
      %s80 = sphi 0, %s80
      %s82 = sphi 0, %s80
      %s83 = sphi 0, %s82
      %s97 = sphi 0, %s83
      %s101 = sphi 0, %s101
      %s103 = sphi 0, %s101
      %s104 = sphi 0, %s103
      %s118 = sphi 0, %s104
      %s126 = sphi 0, %s128
      %s129 = sphi 0, %s126
      %s130 = sphi 0, %s129
      %s146 = sphi 0, %s130
    $region4: #{discriminator_block.3} parent=1 // loop_header_branch
      %14 = sbr.rel (%p12) target = $region8
    $region5: #{discriminator_block.3} parent=1 // loop_body
      %s16 = ssub.s32 %s11, 1
      %s17 = ssub.s32 %s11, 2
      %s24 = sadd.s32 1, %s19
      %p25 = scmp.ge.s32.totalorder %s24, 2
      %s26 = scalar_select %p25, 0, %s24
      %s27 = sadd.s32 1, %s18
      %s28 = scalar_select %p25, %s27, %s18
      %p29 = scmp.ge.s32.totalorder %s28, 2
      %s30 = scalar_select %p29, 0, %s28
      %s31 = ssub.s32 %s18, %s30
      %s32 = ssub.s32 %s19, %s26
      %s33 = sor.u32 %s31, %s32
      %p34 = scmp.eq.s32.totalorder %s33, 0
      %s36 = sadd.s32 %s35, 1
      %s37 = scalar_select %p34, %s35, %s36
      %p40 = pneg %p34
      %p41 = scmp.eq.s32.totalorder %s11, 3
      %p42 = por %p40, %p41
      %p43 = scmp.ne.s32.totalorder %s35, %s38
      %p44 = scmp.eq.s32.totalorder %s11, 0
      %p45 = por %p43, %p44
      %p46 = scmp.ne.s32.totalorder %s35, %s38
      %p47 = scmp.eq.s32.totalorder %s16, 3
      %p48 = por %p46, %p47
      %p49 = scmp.ne.s32.totalorder %s38, %s39
      %p50 = scmp.eq.s32.totalorder %s16, 0
      %p51 = por %p49, %p50
      %p52 = scmp.ne.s32.totalorder %s38, %s39
      %p53 = scmp.eq.s32.totalorder %s17, 3
      %p54 = por %p52, %p53
      %p56 = scmp.ne.s32.totalorder %s39, %s55
      %p57 = scmp.eq.s32.totalorder %s17, 0
      %p58 = por %p56, %p57
      %s60 = sadd.s32 %s59, 1
      %p63 = scmp.eq.s32.totalorder %s11, 3
      %p64 = scmp.ne.s32.totalorder %s59, %s61
      %p65 = scmp.eq.s32.totalorder %s11, 0
      %p66 = por %p64, %p65
      %p67 = scmp.ne.s32.totalorder %s59, %s61
      %p68 = scmp.eq.s32.totalorder %s16, 3
      %p69 = por %p67, %p68
      %p70 = scmp.ne.s32.totalorder %s61, %s62
      %p71 = scmp.eq.s32.totalorder %s16, 0
      %p72 = por %p70, %p71
      %p73 = scmp.ne.s32.totalorder %s61, %s62
      %p74 = scmp.eq.s32.totalorder %s17, 3
      %p75 = por %p73, %p74
      %p77 = scmp.ne.s32.totalorder %s62, %s76
      %p78 = scmp.eq.s32.totalorder %s17, 0
      %p79 = por %p77, %p78
      %s81 = sadd.s32 %s80, 1
      %p84 = scmp.eq.s32.totalorder %s11, 3
      %p85 = scmp.ne.s32.totalorder %s80, %s82
      %p86 = scmp.eq.s32.totalorder %s11, 0
      %p87 = por %p85, %p86
      %p88 = scmp.ne.s32.totalorder %s80, %s82
      %p89 = scmp.eq.s32.totalorder %s16, 3
      %p90 = por %p88, %p89
      %p91 = scmp.ne.s32.totalorder %s82, %s83
      %p92 = scmp.eq.s32.totalorder %s16, 0
      %p93 = por %p91, %p92
      %p94 = scmp.ne.s32.totalorder %s82, %s83
      %p95 = scmp.eq.s32.totalorder %s17, 3
      %p96 = por %p94, %p95
      %p98 = scmp.ne.s32.totalorder %s83, %s97
      %p99 = scmp.eq.s32.totalorder %s17, 0
      %p100 = por %p98, %p99
      %s102 = sadd.s32 %s101, 1
      %p105 = scmp.eq.s32.totalorder %s11, 3
      %p106 = scmp.ne.s32.totalorder %s101, %s103
      %p107 = scmp.eq.s32.totalorder %s11, 0
      %p108 = por %p106, %p107
      %p109 = scmp.ne.s32.totalorder %s101, %s103
      %p110 = scmp.eq.s32.totalorder %s16, 3
      %p111 = por %p109, %p110
      %p112 = scmp.ne.s32.totalorder %s103, %s104
      %p113 = scmp.eq.s32.totalorder %s16, 0
      %p114 = por %p112, %p113
      %p115 = scmp.ne.s32.totalorder %s103, %s104
      %p116 = scmp.eq.s32.totalorder %s17, 3
      %p117 = por %p115, %p116
      %p119 = scmp.ne.s32.totalorder %s104, %s118
      %p120 = scmp.eq.s32.totalorder %s17, 0
      %p121 = por %p119, %p120
      %s122 = ssub.s32 %s18, %s30
      %s123 = ssub.s32 %s19, %s26
      %s124 = sor.u32 %s122, %s123
      %p125 = scmp.eq.s32.totalorder %s124, 0
      %s127 = sadd.s32 %s126, 1
      %s128 = scalar_select %p125, %s126, %s127
      %p131 = pneg %p125
      %p132 = scmp.eq.s32.totalorder %s11, 3
      %p133 = por %p131, %p132
      %p134 = scmp.ne.s32.totalorder %s126, %s129
      %p135 = scmp.eq.s32.totalorder %s11, 0
      %p136 = por %p134, %p135
      %p137 = scmp.ne.s32.totalorder %s126, %s129
      %p138 = scmp.eq.s32.totalorder %s16, 3
      %p139 = por %p137, %p138
      %p140 = scmp.ne.s32.totalorder %s129, %s130
      %p141 = scmp.eq.s32.totalorder %s16, 0
      %p142 = por %p140, %p141
      %p143 = scmp.ne.s32.totalorder %s129, %s130
      %p144 = scmp.eq.s32.totalorder %s17, 3
      %p145 = por %p143, %p144
      %p147 = scmp.ne.s32.totalorder %s130, %s146
      %p148 = scmp.eq.s32.totalorder %s17, 0
      %p149 = por %p147, %p148
      %p150 = scmp.le.s32.totalorder 1, %s11
      %p151 = scmp.lt.s32.totalorder %s11, 5
      %p152 = pnand %p150, %p151
      %p153 = pneg %p152
      // Predicated region
      $region9: #{discriminator_block.3} parent=5 // pred_check
        _
      $region10: #{discriminator_block.3} parent=5 // pred_check_branch
        %155 = sbr.rel (%p152) target = $region12
      $region11: #{discriminator_block.3} parent=5 // pred_region
        %s156 = ssub.s32 %s11, 1
        // Predicated region
        $region13: #{discriminator_block.3} parent=11 // pred_check
          %p157 = pneg %p72
        $region14: #{discriminator_block.3} parent=11 // pred_check_branch
          %159 = sbr.rel (%p157) target = $region16
        $region15: #{discriminator_block.3} parent=11 // pred_region
          _
        $region16: #{discriminator_block.3} parent=11 // pred_fallthru
          _
        // Predicated region
        $region17: #{discriminator_block.3} parent=11 // pred_check
          %p160 = pneg %p93
        $region18: #{discriminator_block.3} parent=11 // pred_check_branch
          %162 = sbr.rel (%p160) target = $region20
        $region19: #{discriminator_block.3} parent=11 // pred_region
          _
        $region20: #{discriminator_block.3} parent=11 // pred_fallthru
          _
        // Predicated region
        $region21: #{discriminator_block.3} parent=11 // pred_check
          %p163 = pneg %p114
        $region22: #{discriminator_block.3} parent=11 // pred_check_branch
          %165 = sbr.rel (%p163) target = $region24
        $region23: #{discriminator_block.3} parent=11 // pred_region
          _
        $region24: #{discriminator_block.3} parent=11 // pred_fallthru
          _
      $region12: #{discriminator_block.3} parent=5 // pred_fallthru
        _
      %p166 = scmp.lt.s32.totalorder %s11, 4
      // Predicated region
      $region25: #{discriminator_block.3} parent=5 // pred_check
        %p167 = pneg %p166
      $region26: #{discriminator_block.3} parent=5 // pred_check_branch
        %169 = sbr.rel (%p167) target = $region28
      $region27: #{discriminator_block.3} parent=5 // pred_region
        // Predicated region
        $region29: #{discriminator_block.3} parent=27 // pred_check
          %p170 = pneg %p45
        $region30: #{discriminator_block.3} parent=27 // pred_check_branch
          %172 = sbr.rel (%p170) target = $region32
        $region31: #{discriminator_block.3} parent=27 // pred_region
          %s173 = smul.u32 16, %s19
          %p174 = scmp.lt.s32.totalorder %s18, 1
          %s175 = scalar_select %p174, %s18, 1
          %p176 = scmp.lt.s32.totalorder %s173, 31
          %s177 = scalar_select %p176, %s173, 31
          %s178 = smul.addr %s175, 32
          %s179 = sadd.s32 %s177, %s178
          %s180 = smul.addr %s179, 4
          %s181 = scalar_lea.vmem %s0, %s180
          %s182 = smul.u32 16, %s19
        $region32: #{discriminator_block.3} parent=27 // pred_fallthru
          _
      $region28: #{discriminator_block.3} parent=5 // pred_fallthru
        _
      %p183 = scmp.le.s32.totalorder 1, %s11
      %p184 = scmp.lt.s32.totalorder %s11, 5
      %p185 = pnand %p183, %p184
      %p186 = pneg %p185
      // Predicated region
      $region33: #{discriminator_block.3} parent=5 // pred_check
        _
      $region34: #{discriminator_block.3} parent=5 // pred_check_branch
        %188 = sbr.rel (%p185) target = $region36
      $region35: #{discriminator_block.3} parent=5 // pred_region
        %s189 = ssub.s32 %s11, 1
        %s190 = smul.u32 16, %s21
        %p191 = scmp.lt.s32.totalorder %s20, 1
        %s192 = scalar_select %p191, %s20, 1
        %p193 = scmp.lt.s32.totalorder %s190, 31
        %s194 = scalar_select %p193, %s190, 31
        %s195 = smul.addr %s192, 32
        %s196 = sadd.s32 %s194, %s195
        %s197 = smul.addr %s196, 4
        %s198 = scalar_lea.vmem %s0, %s197
        %p199 = pneg %p51
        %p200 = pneg %p48
        %p201 = pneg %p72
        %p202 = pneg %p69
        %p203 = pneg %p93
        %p204 = pneg %p90
        %p205 = pneg %p114
        %p206 = pneg %p111
        %p207 = pneg %p142
        %p208 = pneg %p139
        %s209 = sand.u32 %s129, 1
        %s210 = sand.u32 %s129, 1
        %s211 = smul.addr %s210, 128
        %s212 = scalar_lea.vmem [#allocation3], %s211
        %s213 = smul.u32 16, %s21
        %p214 = scmp.lt.s32.totalorder %s20, 1
        %s215 = scalar_select %p214, %s20, 1
        %p216 = scmp.lt.s32.totalorder %s213, 31
        %s217 = scalar_select %p216, %s213, 31
        %s218 = smul.addr %s215, 32
        %s219 = sadd.s32 %s217, %s218
        %s220 = smul.addr %s219, 4
        %s221 = scalar_lea.vmem %s0, %s220
        %s222 = smul.u32 16, %s21
        %v223 = vld [vmem:[%s221] sm:$0xf]
        %v224 = vld [vmem:[%s221 + $0x4] sm:$0xf]
        %v225 = vld [vmem:[%s221 + $0x8] sm:$0xf]
        %v226 = vld [vmem:[%s221 + $0xc] sm:$0xf]
        %v227 = vld [vmem:[%s221 + $0x10] sm:$0xf]
        %v228 = vld [vmem:[%s221 + $0x14] sm:$0xf]
        %v229 = vld [vmem:[%s221 + $0x18] sm:$0xf]
        %v230 = vld [vmem:[%s221 + $0x1c] sm:$0xf]
        %v231 = vld [vmem:[%s221 + $0x20] sm:$0xf]
        %v232 = vld [vmem:[%s221 + $0x24] sm:$0xf]
        %v233 = vld [vmem:[%s221 + $0x28] sm:$0xf]
        %v234 = vld [vmem:[%s221 + $0x2c] sm:$0xf]
        %v235 = vld [vmem:[%s221 + $0x30] sm:$0xf]
        %v236 = vld [vmem:[%s221 + $0x34] sm:$0xf]
        %v237 = vld [vmem:[%s221 + $0x38] sm:$0xf]
        %v238 = vld [vmem:[%s221 + $0x3c] sm:$0xf]
        %v239 = vunpack.c.l.bf16 %v223
        %v240 = vunpack.c.l.bf16 %v224
        %v241 = vunpack.c.l.bf16 %v225
        %v242 = vunpack.c.l.bf16 %v226
        %v243 = vunpack.c.l.bf16 %v227
        %v244 = vunpack.c.l.bf16 %v228
        %v245 = vunpack.c.l.bf16 %v229
        %v246 = vunpack.c.l.bf16 %v230
        %v247 = vunpack.c.l.bf16 %v231
        %v248 = vunpack.c.l.bf16 %v232
        %v249 = vunpack.c.l.bf16 %v233
        %v250 = vunpack.c.l.bf16 %v234
        %v251 = vunpack.c.l.bf16 %v235
        %v252 = vunpack.c.l.bf16 %v236
        %v253 = vunpack.c.l.bf16 %v237
        %v254 = vunpack.c.l.bf16 %v238
        %v255 = vld [vmem:[%s1] sm:$0x1]
        %v257 = vlaneseq
        %v258 = vshrl.u32 %v257, 7
        %v259 = vsub.s32 0, %v258
        %v260 = vrot.slane %v255, %v259
        %v262 = vmul.f32 %v239, %v260
        %v263 = vmul.f32 %v240, %v260
        %v264 = vmul.f32 %v241, %v260
        %v265 = vmul.f32 %v242, %v260
        %v266 = vmul.f32 %v243, %v260
        %v267 = vmul.f32 %v244, %v260
        %v268 = vmul.f32 %v245, %v260
        %v269 = vmul.f32 %v246, %v260
        %v270 = vmul.f32 %v247, %v260
        %v271 = vmul.f32 %v248, %v260
        %v272 = vmul.f32 %v249, %v260
        %v273 = vmul.f32 %v250, %v260
        %v274 = vmul.f32 %v251, %v260
        %v275 = vmul.f32 %v252, %v260
        %v276 = vmul.f32 %v253, %v260
        %v277 = vmul.f32 %v254, %v260
        %v278 = vld [vmem:[%s2] sm:$0x1]
        %v280 = vlaneseq
        %v281 = vshrl.u32 %v280, 7
        %v282 = vsub.s32 0, %v281
        %v283 = vrot.slane %v278, %v282
        %v285 = vadd.f32 %v262, %v283
        %v286 = vadd.f32 %v263, %v283
        %v287 = vadd.f32 %v264, %v283
        %v288 = vadd.f32 %v265, %v283
        %v289 = vadd.f32 %v266, %v283
        %v290 = vadd.f32 %v267, %v283
        %v291 = vadd.f32 %v268, %v283
        %v292 = vadd.f32 %v269, %v283
        %v293 = vadd.f32 %v270, %v283
        %v294 = vadd.f32 %v271, %v283
        %v295 = vadd.f32 %v272, %v283
        %v296 = vadd.f32 %v273, %v283
        %v297 = vadd.f32 %v274, %v283
        %v298 = vadd.f32 %v275, %v283
        %v299 = vadd.f32 %v276, %v283
        %v300 = vadd.f32 %v277, %v283
        %s301 = sld [smem:[#allocation2]]
        %vm302 = vcmp.ge.f32.partialorder %v285, 0.0
        %vm303 = vcmp.ge.f32.partialorder %v286, 0.0
        %vm304 = vcmp.ge.f32.partialorder %v287, 0.0
        %vm305 = vcmp.ge.f32.partialorder %v288, 0.0
        %vm306 = vcmp.ge.f32.partialorder %v289, 0.0
        %vm307 = vcmp.ge.f32.partialorder %v290, 0.0
        %vm308 = vcmp.ge.f32.partialorder %v291, 0.0
        %vm309 = vcmp.ge.f32.partialorder %v292, 0.0
        %vm310 = vcmp.ge.f32.partialorder %v293, 0.0
        %vm311 = vcmp.ge.f32.partialorder %v294, 0.0
        %vm312 = vcmp.ge.f32.partialorder %v295, 0.0
        %vm313 = vcmp.ge.f32.partialorder %v296, 0.0
        %vm314 = vcmp.ge.f32.partialorder %v297, 0.0
        %vm315 = vcmp.ge.f32.partialorder %v298, 0.0
        %vm316 = vcmp.ge.f32.partialorder %v299, 0.0
        %vm317 = vcmp.ge.f32.partialorder %v300, 0.0
        %v318 = vstv %s301
        %v319 = vmul.f32 %v318, %v285
        %v320 = vmul.f32 %v318, %v286
        %v321 = vmul.f32 %v318, %v287
        %v322 = vmul.f32 %v318, %v288
        %v323 = vmul.f32 %v318, %v289
        %v324 = vmul.f32 %v318, %v290
        %v325 = vmul.f32 %v318, %v291
        %v326 = vmul.f32 %v318, %v292
        %v327 = vmul.f32 %v318, %v293
        %v328 = vmul.f32 %v318, %v294
        %v329 = vmul.f32 %v318, %v295
        %v330 = vmul.f32 %v318, %v296
        %v331 = vmul.f32 %v318, %v297
        %v332 = vmul.f32 %v318, %v298
        %v333 = vmul.f32 %v318, %v299
        %v334 = vmul.f32 %v318, %v300
        %v335 = vsel %vm302, %v285, %v319
        %v336 = vsel %vm303, %v286, %v320
        %v337 = vsel %vm304, %v287, %v321
        %v338 = vsel %vm305, %v288, %v322
        %v339 = vsel %vm306, %v289, %v323
        %v340 = vsel %vm307, %v290, %v324
        %v341 = vsel %vm308, %v291, %v325
        %v342 = vsel %vm309, %v292, %v326
        %v343 = vsel %vm310, %v293, %v327
        %v344 = vsel %vm311, %v294, %v328
        %v345 = vsel %vm312, %v295, %v329
        %v346 = vsel %vm313, %v296, %v330
        %v347 = vsel %vm314, %v297, %v331
        %v348 = vsel %vm315, %v298, %v332
        %v349 = vsel %vm316, %v299, %v333
        %v350 = vsel %vm317, %v300, %v334
        %351 = vxpose.xlu0.b32.start [1/16] %v335, 128
        %352 = vxpose.xlu0.b32.cont [2/16] %v336, 128
        %353 = vxpose.xlu0.b32.cont [3/16] %v337, 128
        %354 = vxpose.xlu0.b32.cont [4/16] %v338, 128
        %355 = vxpose.xlu0.b32.cont [5/16] %v339, 128
        %356 = vxpose.xlu0.b32.cont [6/16] %v340, 128
        %357 = vxpose.xlu0.b32.cont [7/16] %v341, 128
        %358 = vxpose.xlu0.b32.cont [8/16] %v342, 128
        %359 = vxpose.xlu0.b32.cont [9/16] %v343, 128
        %360 = vxpose.xlu0.b32.cont [10/16] %v344, 128
        %361 = vxpose.xlu0.b32.cont [11/16] %v345, 128
        %362 = vxpose.xlu0.b32.cont [12/16] %v346, 128
        %363 = vxpose.xlu0.b32.cont [13/16] %v347, 128
        %364 = vxpose.xlu0.b32.cont [14/16] %v348, 128
        %365 = vxpose.xlu0.b32.cont [15/16] %v349, 128
        %366 = vxpose.xlu0.b32.end [16/16] %v350, 128
        %v367 = vpop.trf.xlu0
        %v368 = vpop.trf.xlu0
        %v369 = vpop.trf.xlu0
        %v370 = vpop.trf.xlu0
        %v371 = vpop.trf.xlu0
        %v372 = vpop.trf.xlu0
        %v373 = vpop.trf.xlu0
        %v374 = vpop.trf.xlu0
        %v375 = vpop.trf.xlu0
        %v376 = vpop.trf.xlu0
        %v377 = vpop.trf.xlu0
        %v378 = vpop.trf.xlu0
        %v379 = vpop.trf.xlu0
        %v380 = vpop.trf.xlu0
        %v381 = vpop.trf.xlu0
        %v382 = vpop.trf.xlu0
        %383 = vst [vmem:[%s212] sm:$0xff] %v367
        %384 = vst [vmem:[%s212 + $0x8] sm:$0xff] %v368
        %385 = vst [vmem:[%s212 + $0x10] sm:$0xff] %v369
        %386 = vst [vmem:[%s212 + $0x18] sm:$0xff] %v370
        %387 = vst [vmem:[%s212 + $0x20] sm:$0xff] %v371
        %388 = vst [vmem:[%s212 + $0x28] sm:$0xff] %v372
        %389 = vst [vmem:[%s212 + $0x30] sm:$0xff] %v373
        %390 = vst [vmem:[%s212 + $0x38] sm:$0xff] %v374
        %391 = vst [vmem:[%s212 + $0x40] sm:$0xff] %v375
        %392 = vst [vmem:[%s212 + $0x48] sm:$0xff] %v376
        %393 = vst [vmem:[%s212 + $0x50] sm:$0xff] %v377
        %394 = vst [vmem:[%s212 + $0x58] sm:$0xff] %v378
        %395 = vst [vmem:[%s212 + $0x60] sm:$0xff] %v379
        %396 = vst [vmem:[%s212 + $0x68] sm:$0xff] %v380
        %397 = vst [vmem:[%s212 + $0x70] sm:$0xff] %v381
        %398 = vst [vmem:[%s212 + $0x78] sm:$0xff] %v382
        %s399 = sand.u32 %s129, 1
        %s400 = sand.u32 %s129, 1
        %s401 = smul.addr %s400, 128
        %s402 = scalar_lea.vmem [#allocation3], %s401
        // Predicated region
        $region37: #{discriminator_block.3} parent=35 // pred_check
          %p403 = pneg %p139
        $region38: #{discriminator_block.3} parent=35 // pred_check_branch
          %405 = sbr.rel (%p403) target = $region40
        $region39: #{discriminator_block.3} parent=35 // pred_region
          %s406 = smul.addr %s20, 32
          %s407 = sadd.s32 %s21, %s406
          %s408 = smul.addr %s407, 8
          %s409 = scalar_lea.vmem %s4, %s408
          // Predicated region
          $region41: #{discriminator_block.3} parent=39 // pred_check
            _
          $region42: #{discriminator_block.3} parent=39 // pred_check_branch
            %411 = sbr.rel (0) target = $region44
          $region43: #{discriminator_block.3} parent=39 // pred_region
            // Predicated region
            $region45: #{discriminator_block.3} parent=43 // pred_check
              _
            $region46: #{discriminator_block.3} parent=43 // pred_check_branch
              %413 = sbr.rel (0) target = $region48
            $region47: #{discriminator_block.3} parent=43 // pred_region
              // Predicated region
              $region60: #{discriminator_block.3} parent=47 // pred_check
                _
              $region61: #{discriminator_block.3} parent=47 // pred_check_branch
                %459 = sbr.rel (0) target = $region63
              $region62: #{discriminator_block.3} parent=47 // pred_region
                loop: start=0, step=1, limit=1
                $region64: #{discriminator_block.3} parent=62 // loop_pre_header
                  _
                $region65: #{discriminator_block.3} parent=62 // loop_header
                  %s461 = sphi 0, %s465
                  %p462 = scmp.ge.s32.totalorder %s461, 1
                  %s466 = sphi %s402, %s402
                  %s467 = sphi %s409, %s409
                $region66: #{discriminator_block.3} parent=62 // loop_header_branch
                  %464 = sbr.rel (%p462) target = $region70
                $region67: #{discriminator_block.3} parent=62 // loop_body
                  %v468 = vld [vmem:[%s466] sm:$0xff]
                  %469 = vst [vmem:[%s467] sm:$0xff] %v468
                  %v470 = vld [vmem:[%s466 + $0x8] sm:$0xff]
                  %471 = vst [vmem:[%s467 + $0x10] sm:$0xff] %v470
                  %v472 = vld [vmem:[%s466 + $0x10] sm:$0xff]
                  %473 = vst [vmem:[%s467 + $0x20] sm:$0xff] %v472
                  %v474 = vld [vmem:[%s466 + $0x18] sm:$0xff]
                  %475 = vst [vmem:[%s467 + $0x30] sm:$0xff] %v474
                  %v476 = vld [vmem:[%s466 + $0x20] sm:$0xff]
                  %477 = vst [vmem:[%s467 + $0x40] sm:$0xff] %v476
                  %v478 = vld [vmem:[%s466 + $0x28] sm:$0xff]
                  %479 = vst [vmem:[%s467 + $0x50] sm:$0xff] %v478
                  %v480 = vld [vmem:[%s466 + $0x30] sm:$0xff]
                  %481 = vst [vmem:[%s467 + $0x60] sm:$0xff] %v480
                  %v482 = vld [vmem:[%s466 + $0x38] sm:$0xff]
                  %483 = vst [vmem:[%s467 + $0x70] sm:$0xff] %v482
                  %v484 = vld [vmem:[%s466 + $0x40] sm:$0xff]
                  %485 = vst [vmem:[%s467 + $0x80] sm:$0xff] %v484
                  %v486 = vld [vmem:[%s466 + $0x48] sm:$0xff]
                  %487 = vst [vmem:[%s467 + $0x90] sm:$0xff] %v486
                  %v488 = vld [vmem:[%s466 + $0x50] sm:$0xff]
                  %489 = vst [vmem:[%s467 + $0xa0] sm:$0xff] %v488
                  %v490 = vld [vmem:[%s466 + $0x58] sm:$0xff]
                  %491 = vst [vmem:[%s467 + $0xb0] sm:$0xff] %v490
                  %v492 = vld [vmem:[%s466 + $0x60] sm:$0xff]
                  %493 = vst [vmem:[%s467 + $0xc0] sm:$0xff] %v492
                  %v494 = vld [vmem:[%s466 + $0x68] sm:$0xff]
                  %495 = vst [vmem:[%s467 + $0xd0] sm:$0xff] %v494
                  %v496 = vld [vmem:[%s466 + $0x70] sm:$0xff]
                  %497 = vst [vmem:[%s467 + $0xe0] sm:$0xff] %v496
                  %v498 = vld [vmem:[%s466 + $0x78] sm:$0xff]
                  %499 = vst [vmem:[%s467 + $0xf0] sm:$0xff] %v498
                $region68: #{discriminator_block.3} parent=62 // loop_footer
                  %s465 = sadd.s32 1, %s461
                $region69: #{discriminator_block.3} parent=62 // loop_footer_branch
                  %460 = sbr.rel target = $region65
                $region70: #{discriminator_block.3} parent=62 // loop_exit
                  _
              $region63: #{discriminator_block.3} parent=47 // pred_fallthru
                _
              // Predicated region
              $region71: #{discriminator_block.3} parent=47 // pred_check
                _
              $region72: #{discriminator_block.3} parent=47 // pred_check_branch
                %501 = sbr.rel target = $region74
              $region73: #{discriminator_block.3} parent=47 // pred_region
                _
              $region74: #{discriminator_block.3} parent=47 // pred_fallthru
                _
            $region48: #{discriminator_block.3} parent=43 // pred_fallthru
              _
            // Predicated region
            $region49: #{discriminator_block.3} parent=43 // pred_check
              _
            $region50: #{discriminator_block.3} parent=43 // pred_check_branch
              %415 = sbr.rel target = $region52
            $region51: #{discriminator_block.3} parent=43 // pred_region
              %s417 = ssub.s32 256, 1
              loop: start=0, step=1, limit=1
              $region53: #{discriminator_block.3} parent=51 // loop_pre_header
                _
              $region54: #{discriminator_block.3} parent=51 // loop_header
                %s419 = sphi 0, %s423
                %p420 = scmp.ge.s32.totalorder %s419, 1
                %s424 = sphi %s402, %s402
                %s425 = sphi %s409, %s409
              $region55: #{discriminator_block.3} parent=51 // loop_header_branch
                %422 = sbr.rel (%p420) target = $region59
              $region56: #{discriminator_block.3} parent=51 // loop_body
                %v426 = vld [vmem:[%s424] sm:%s417]
                %427 = vst [vmem:[%s425] sm:%s417] %v426
                %v428 = vld [vmem:[%s424 + $0x8] sm:%s417]
                %429 = vst [vmem:[%s425 + $0x10] sm:%s417] %v428
                %v430 = vld [vmem:[%s424 + $0x10] sm:%s417]
                %431 = vst [vmem:[%s425 + $0x20] sm:%s417] %v430
                %v432 = vld [vmem:[%s424 + $0x18] sm:%s417]
                %433 = vst [vmem:[%s425 + $0x30] sm:%s417] %v432
                %v434 = vld [vmem:[%s424 + $0x20] sm:%s417]
                %435 = vst [vmem:[%s425 + $0x40] sm:%s417] %v434
                %v436 = vld [vmem:[%s424 + $0x28] sm:%s417]
                %437 = vst [vmem:[%s425 + $0x50] sm:%s417] %v436
                %v438 = vld [vmem:[%s424 + $0x30] sm:%s417]
                %439 = vst [vmem:[%s425 + $0x60] sm:%s417] %v438
                %v440 = vld [vmem:[%s424 + $0x38] sm:%s417]
                %441 = vst [vmem:[%s425 + $0x70] sm:%s417] %v440
                %v442 = vld [vmem:[%s424 + $0x40] sm:%s417]
                %443 = vst [vmem:[%s425 + $0x80] sm:%s417] %v442
                %v444 = vld [vmem:[%s424 + $0x48] sm:%s417]
                %445 = vst [vmem:[%s425 + $0x90] sm:%s417] %v444
                %v446 = vld [vmem:[%s424 + $0x50] sm:%s417]
                %447 = vst [vmem:[%s425 + $0xa0] sm:%s417] %v446
                %v448 = vld [vmem:[%s424 + $0x58] sm:%s417]
                %449 = vst [vmem:[%s425 + $0xb0] sm:%s417] %v448
                %v450 = vld [vmem:[%s424 + $0x60] sm:%s417]
                %451 = vst [vmem:[%s425 + $0xc0] sm:%s417] %v450
                %v452 = vld [vmem:[%s424 + $0x68] sm:%s417]
                %453 = vst [vmem:[%s425 + $0xd0] sm:%s417] %v452
                %v454 = vld [vmem:[%s424 + $0x70] sm:%s417]
                %455 = vst [vmem:[%s425 + $0xe0] sm:%s417] %v454
                %v456 = vld [vmem:[%s424 + $0x78] sm:%s417]
                %457 = vst [vmem:[%s425 + $0xf0] sm:%s417] %v456
              $region57: #{discriminator_block.3} parent=51 // loop_footer
                %s423 = sadd.s32 1, %s419
              $region58: #{discriminator_block.3} parent=51 // loop_footer_branch
                %418 = sbr.rel target = $region54
              $region59: #{discriminator_block.3} parent=51 // loop_exit
                _
            $region52: #{discriminator_block.3} parent=43 // pred_fallthru
              _
          $region44: #{discriminator_block.3} parent=39 // pred_fallthru
            _
          %502 = vnop
        $region40: #{discriminator_block.3} parent=35 // pred_fallthru
          _
      $region36: #{discriminator_block.3} parent=5 // pred_fallthru
        _
      %p503 = scmp.le.s32.totalorder 2, %s11
      // Predicated region
      $region75: #{discriminator_block.3} parent=5 // pred_check
        %p504 = pneg %p503
      $region76: #{discriminator_block.3} parent=5 // pred_check_branch
        %506 = sbr.rel (%p504) target = $region78
      $region77: #{discriminator_block.3} parent=5 // pred_region
        %s507 = ssub.s32 %s11, 2
        // Predicated region
        $region79: #{discriminator_block.3} parent=77 // pred_check
          %p508 = pneg %p145
        $region80: #{discriminator_block.3} parent=77 // pred_check_branch
          %510 = sbr.rel (%p508) target = $region82
        $region81: #{discriminator_block.3} parent=77 // pred_region
          %s511 = sand.u32 %s130, 1
          %s512 = sand.u32 %s130, 1
          %s513 = smul.addr %s512, 128
          %s514 = scalar_lea.vmem [#allocation3], %s513
        $region82: #{discriminator_block.3} parent=77 // pred_fallthru
          _
      $region78: #{discriminator_block.3} parent=5 // pred_fallthru
        _
    $region6: #{discriminator_block.3} parent=1 // loop_footer
      %s15 = sadd.s32 1, %s11
    $region7: #{discriminator_block.3} parent=1 // loop_footer_branch
      %10 = sbr.rel target = $region3
    $region8: #{discriminator_block.3} parent=1 // loop_exit
      _

// kernel: discriminator_block.2
$region0: #{discriminator_block.2}
  #allocation0 [shape = 'u32[]', space=smem, size = 0x4, offset = 0x4, fixed_abs, tag = 'smem constant byte address 0x4 - core index']
  #allocation1 [shape = 'u32[144,128]{1,0:T(1,128)}', space=vmem, size = 0x12000, scoped, tag = 'internal scratch']
  %s0 = inlined_call_operand.vmem [shape: bf16[2,256,36], index: 0, kind: input, shape index: {}]
  %s1 = inlined_call_operand.vmem [shape: bf16[36,128], index: 1, kind: input, shape index: {}]
  %s2 = inlined_call_operand.vmem [shape: bf16[2,256,128], index: 2, kind: output, shape index: {0}]
  %s3 = inlined_call_operand.vmem [shape: f32[4,1,128], index: 3, kind: output, shape index: {1}]
  %s4 = inlined_call_operand.vmem [shape: f32[4,1,128], index: 4, kind: output, shape index: {2}]
  %5 = xla_tuple %s2, %s3, %s4
  %s6 = sld [smem:[#allocation0]]
  $region57: #{discriminator_block.2} parent=0
    _
  %s8 = ssub.s32 1, %s6
  %s9 = scalar_select 0, %s8, %s6
  loop: start=0, step=1, limit=6
  $region2: #{discriminator_block.2} parent=0 // loop_pre_header
    _
  $region3: #{discriminator_block.2} parent=0 // loop_header
    %s11 = sphi 0, %s15
    %p12 = scmp.ge.s32.totalorder %s11, 6
    %s18 = sphi 0, %s30
    %s19 = sphi 0, %s26
    %s20 = sphi 0, %s18
    %s21 = sphi 0, %s19
    %s22 = sphi 0, %s20
    %s23 = sphi 0, %s21
    %s35 = sphi 0, %s37
    %s38 = sphi 0, %s35
    %s39 = sphi 0, %s38
    %s55 = sphi 0, %s39
    %s59 = sphi 0, %s59
    %s61 = sphi 0, %s59
    %s62 = sphi 0, %s61
    %s76 = sphi 0, %s62
    %s84 = sphi 0, %s86
    %s87 = sphi 0, %s84
    %s88 = sphi 0, %s87
    %s104 = sphi 0, %s88
    %s114 = sphi 0, %s116
    %s117 = sphi 0, %s114
    %s118 = sphi 0, %s117
    %s134 = sphi 0, %s118
    %s144 = sphi 0, %s146
    %s147 = sphi 0, %s144
    %s148 = sphi 0, %s147
    %s164 = sphi 0, %s148
  $region4: #{discriminator_block.2} parent=0 // loop_header_branch
    %14 = sbr.rel (%p12) target = $region8
  $region5: #{discriminator_block.2} parent=0 // loop_body
    %s16 = ssub.s32 %s11, 1
    %s17 = ssub.s32 %s11, 2
    %s24 = sadd.s32 1, %s19
    %p25 = scmp.ge.s32.totalorder %s24, 2
    %s26 = scalar_select %p25, 0, %s24
    %s27 = sadd.s32 1, %s18
    %s28 = scalar_select %p25, %s27, %s18
    %p29 = scmp.ge.s32.totalorder %s28, 2
    %s30 = scalar_select %p29, 0, %s28
    %s31 = ssub.s32 %s18, %s30
    %s32 = ssub.s32 %s19, %s26
    %s33 = sor.u32 %s31, %s32
    %p34 = scmp.eq.s32.totalorder %s33, 0
    %s36 = sadd.s32 %s35, 1
    %s37 = scalar_select %p34, %s35, %s36
    %p40 = pneg %p34
    %p41 = scmp.eq.s32.totalorder %s11, 3
    %p42 = por %p40, %p41
    %p43 = scmp.ne.s32.totalorder %s35, %s38
    %p44 = scmp.eq.s32.totalorder %s11, 0
    %p45 = por %p43, %p44
    %p46 = scmp.ne.s32.totalorder %s35, %s38
    %p47 = scmp.eq.s32.totalorder %s16, 3
    %p48 = por %p46, %p47
    %p49 = scmp.ne.s32.totalorder %s38, %s39
    %p50 = scmp.eq.s32.totalorder %s16, 0
    %p51 = por %p49, %p50
    %p52 = scmp.ne.s32.totalorder %s38, %s39
    %p53 = scmp.eq.s32.totalorder %s17, 3
    %p54 = por %p52, %p53
    %p56 = scmp.ne.s32.totalorder %s39, %s55
    %p57 = scmp.eq.s32.totalorder %s17, 0
    %p58 = por %p56, %p57
    %s60 = sadd.s32 %s59, 1
    %p63 = scmp.eq.s32.totalorder %s11, 3
    %p64 = scmp.ne.s32.totalorder %s59, %s61
    %p65 = scmp.eq.s32.totalorder %s11, 0
    %p66 = por %p64, %p65
    %p67 = scmp.ne.s32.totalorder %s59, %s61
    %p68 = scmp.eq.s32.totalorder %s16, 3
    %p69 = por %p67, %p68
    %p70 = scmp.ne.s32.totalorder %s61, %s62
    %p71 = scmp.eq.s32.totalorder %s16, 0
    %p72 = por %p70, %p71
    %p73 = scmp.ne.s32.totalorder %s61, %s62
    %p74 = scmp.eq.s32.totalorder %s17, 3
    %p75 = por %p73, %p74
    %p77 = scmp.ne.s32.totalorder %s62, %s76
    %p78 = scmp.eq.s32.totalorder %s17, 0
    %p79 = por %p77, %p78
    %s80 = ssub.s32 %s18, %s30
    %s81 = ssub.s32 %s19, %s26
    %s82 = sor.u32 %s80, %s81
    %p83 = scmp.eq.s32.totalorder %s82, 0
    %s85 = sadd.s32 %s84, 1
    %s86 = scalar_select %p83, %s84, %s85
    %p89 = pneg %p83
    %p90 = scmp.eq.s32.totalorder %s11, 3
    %p91 = por %p89, %p90
    %p92 = scmp.ne.s32.totalorder %s84, %s87
    %p93 = scmp.eq.s32.totalorder %s11, 0
    %p94 = por %p92, %p93
    %p95 = scmp.ne.s32.totalorder %s84, %s87
    %p96 = scmp.eq.s32.totalorder %s16, 3
    %p97 = por %p95, %p96
    %p98 = scmp.ne.s32.totalorder %s87, %s88
    %p99 = scmp.eq.s32.totalorder %s16, 0
    %p100 = por %p98, %p99
    %p101 = scmp.ne.s32.totalorder %s87, %s88
    %p102 = scmp.eq.s32.totalorder %s17, 3
    %p103 = por %p101, %p102
    %p105 = scmp.ne.s32.totalorder %s88, %s104
    %p106 = scmp.eq.s32.totalorder %s17, 0
    %p107 = por %p105, %p106
    %s108 = smul.u32 %s18, 2
    %s109 = sadd.s32 %s108, %s19
    %s110 = smul.u32 %s30, 2
    %s111 = sadd.s32 %s110, %s26
    %s112 = ssub.s32 %s109, %s111
    %p113 = scmp.eq.s32.totalorder %s112, 0
    %s115 = sadd.s32 %s114, 1
    %s116 = scalar_select %p113, %s114, %s115
    %p119 = pneg %p113
    %p120 = scmp.eq.s32.totalorder %s11, 3
    %p121 = por %p119, %p120
    %p122 = scmp.ne.s32.totalorder %s114, %s117
    %p123 = scmp.eq.s32.totalorder %s11, 0
    %p124 = por %p122, %p123
    %p125 = scmp.ne.s32.totalorder %s114, %s117
    %p126 = scmp.eq.s32.totalorder %s16, 3
    %p127 = por %p125, %p126
    %p128 = scmp.ne.s32.totalorder %s117, %s118
    %p129 = scmp.eq.s32.totalorder %s16, 0
    %p130 = por %p128, %p129
    %p131 = scmp.ne.s32.totalorder %s117, %s118
    %p132 = scmp.eq.s32.totalorder %s17, 3
    %p133 = por %p131, %p132
    %p135 = scmp.ne.s32.totalorder %s118, %s134
    %p136 = scmp.eq.s32.totalorder %s17, 0
    %p137 = por %p135, %p136
    %s138 = smul.u32 %s18, 2
    %s139 = sadd.s32 %s138, %s19
    %s140 = smul.u32 %s30, 2
    %s141 = sadd.s32 %s140, %s26
    %s142 = ssub.s32 %s139, %s141
    %p143 = scmp.eq.s32.totalorder %s142, 0
    %s145 = sadd.s32 %s144, 1
    %s146 = scalar_select %p143, %s144, %s145
    %p149 = pneg %p143
    %p150 = scmp.eq.s32.totalorder %s11, 3
    %p151 = por %p149, %p150
    %p152 = scmp.ne.s32.totalorder %s144, %s147
    %p153 = scmp.eq.s32.totalorder %s11, 0
    %p154 = por %p152, %p153
    %p155 = scmp.ne.s32.totalorder %s144, %s147
    %p156 = scmp.eq.s32.totalorder %s16, 3
    %p157 = por %p155, %p156
    %p158 = scmp.ne.s32.totalorder %s147, %s148
    %p159 = scmp.eq.s32.totalorder %s16, 0
    %p160 = por %p158, %p159
    %p161 = scmp.ne.s32.totalorder %s147, %s148
    %p162 = scmp.eq.s32.totalorder %s17, 3
    %p163 = por %p161, %p162
    %p165 = scmp.ne.s32.totalorder %s148, %s164
    %p166 = scmp.eq.s32.totalorder %s17, 0
    %p167 = por %p165, %p166
    %p168 = scmp.le.s32.totalorder 1, %s11
    %p169 = scmp.lt.s32.totalorder %s11, 5
    %p170 = pnand %p168, %p169
    %p171 = pneg %p170
    // Predicated region
    $region9: #{discriminator_block.2} parent=5 // pred_check
      _
    $region10: #{discriminator_block.2} parent=5 // pred_check_branch
      %173 = sbr.rel (%p170) target = $region12
    $region11: #{discriminator_block.2} parent=5 // pred_region
      %s174 = ssub.s32 %s11, 1
      // Predicated region
      $region13: #{discriminator_block.2} parent=11 // pred_check
        %p175 = pneg %p72
      $region14: #{discriminator_block.2} parent=11 // pred_check_branch
        %177 = sbr.rel (%p175) target = $region16
      $region15: #{discriminator_block.2} parent=11 // pred_region
        _
      $region16: #{discriminator_block.2} parent=11 // pred_fallthru
        _
    $region12: #{discriminator_block.2} parent=5 // pred_fallthru
      _
    %p178 = scmp.lt.s32.totalorder %s11, 4
    // Predicated region
    $region17: #{discriminator_block.2} parent=5 // pred_check
      %p179 = pneg %p178
    $region18: #{discriminator_block.2} parent=5 // pred_check_branch
      %181 = sbr.rel (%p179) target = $region20
    $region19: #{discriminator_block.2} parent=5 // pred_region
      // Predicated region
      $region21: #{discriminator_block.2} parent=19 // pred_check
        %p182 = pneg %p45
      $region22: #{discriminator_block.2} parent=19 // pred_check_branch
        %184 = sbr.rel (%p182) target = $region24
      $region23: #{discriminator_block.2} parent=19 // pred_region
        %s185 = smul.u32 16, %s19
        %p186 = scmp.lt.s32.totalorder %s18, 1
        %s187 = scalar_select %p186, %s18, 1
        %p188 = scmp.lt.s32.totalorder %s185, 31
        %s189 = scalar_select %p188, %s185, 31
        %s190 = smul.addr %s187, 32
        %s191 = sadd.s32 %s189, %s190
        %s192 = smul.addr %s191, 4
        %s193 = scalar_lea.vmem %s0, %s192
        %s194 = smul.u32 16, %s19
      $region24: #{discriminator_block.2} parent=19 // pred_fallthru
        _
    $region20: #{discriminator_block.2} parent=5 // pred_fallthru
      _
    %p195 = scmp.le.s32.totalorder 1, %s11
    %p196 = scmp.lt.s32.totalorder %s11, 5
    %p197 = pnand %p195, %p196
    %p198 = pneg %p197
    // Predicated region
    $region25: #{discriminator_block.2} parent=5 // pred_check
      _
    $region26: #{discriminator_block.2} parent=5 // pred_check_branch
      %200 = sbr.rel (%p197) target = $region28
    $region27: #{discriminator_block.2} parent=5 // pred_region
      %s201 = ssub.s32 %s11, 1
      %s202 = smul.u32 16, %s21
      %p203 = scmp.lt.s32.totalorder %s20, 1
      %s204 = scalar_select %p203, %s20, 1
      %p205 = scmp.lt.s32.totalorder %s202, 31
      %s206 = scalar_select %p205, %s202, 31
      %s207 = smul.addr %s204, 32
      %s208 = sadd.s32 %s206, %s207
      %s209 = smul.addr %s208, 4
      %s210 = scalar_lea.vmem %s0, %s209
      %p211 = pneg %p51
      %p212 = pneg %p48
      %p213 = pneg %p72
      %p214 = pneg %p69
      %p215 = pneg %p100
      %p216 = pneg %p97
      %s217 = smul.u32 16, %s21
      %p218 = scmp.lt.s32.totalorder %s20, 1
      %s219 = scalar_select %p218, %s20, 1
      %p220 = scmp.lt.s32.totalorder %s217, 31
      %s221 = scalar_select %p220, %s217, 31
      %s222 = smul.addr %s219, 32
      %s223 = sadd.s32 %s221, %s222
      %s224 = smul.addr %s223, 4
      %s225 = scalar_lea.vmem %s2, %s224
      %p226 = pneg %p130
      %p227 = pneg %p127
      %s228 = smul.u32 %s20, 2
      %s229 = sadd.s32 %s228, %s21
      %p230 = scmp.lt.s32.totalorder %s229, 3
      %s231 = scalar_select %p230, %s229, 3
      %s232 = scalar_lea.vmem %s3, %s231
      %p233 = pneg %p160
      %p234 = pneg %p157
      %s235 = smul.u32 %s20, 2
      %s236 = sadd.s32 %s235, %s21
      %p237 = scmp.lt.s32.totalorder %s236, 3
      %s238 = scalar_select %p237, %s236, 3
      %s239 = scalar_lea.vmem %s4, %s238
      %s240 = smul.u32 16, %s21
      %p241 = scmp.lt.s32.totalorder %s20, 1
      %s242 = scalar_select %p241, %s20, 1
      %p243 = scmp.lt.s32.totalorder %s240, 31
      %s244 = scalar_select %p243, %s240, 31
      %s245 = smul.addr %s242, 32
      %s246 = sadd.s32 %s244, %s245
      %s247 = smul.addr %s246, 4
      %s248 = scalar_lea.vmem %s0, %s247
      %s249 = smul.u32 16, %s21
      %s250 = smul.u32 16, %s21
      %p251 = scmp.lt.s32.totalorder %s20, 1
      %s252 = scalar_select %p251, %s20, 1
      %p253 = scmp.lt.s32.totalorder %s250, 31
      %s254 = scalar_select %p253, %s250, 31
      %s255 = smul.addr %s252, 32
      %s256 = sadd.s32 %s254, %s255
      %s257 = smul.addr %s256, 4
      %s258 = scalar_lea.vmem %s2, %s257
      %s259 = smul.u32 16, %s21
      %s260 = smul.u32 %s20, 2
      %s261 = sadd.s32 %s260, %s21
      %p262 = scmp.lt.s32.totalorder %s261, 3
      %s263 = scalar_select %p262, %s261, 3
      %s264 = scalar_lea.vmem %s3, %s263
      %s265 = smul.u32 %s20, 2
      %s266 = sadd.s32 %s265, %s21
      %s267 = smul.u32 %s20, 2
      %s268 = sadd.s32 %s267, %s21
      %p269 = scmp.lt.s32.totalorder %s268, 3
      %s270 = scalar_select %p269, %s268, 3
      %s271 = scalar_lea.vmem %s4, %s270
      %s272 = smul.u32 %s20, 2
      %s273 = sadd.s32 %s272, %s21
      %v275 = vld [vmem:[%s248] sm:$0xf]
      %v276 = vld [vmem:[%s248 + $0x4] sm:$0xf]
      %v277 = vld [vmem:[%s248 + $0x8] sm:$0xf]
      %v278 = vld [vmem:[%s248 + $0xc] sm:$0xf]
      %v279 = vld [vmem:[%s248 + $0x10] sm:$0xf]
      %v280 = vld [vmem:[%s248 + $0x14] sm:$0xf]
      %v281 = vld [vmem:[%s248 + $0x18] sm:$0xf]
      %v282 = vld [vmem:[%s248 + $0x1c] sm:$0xf]
      %v283 = vld [vmem:[%s248 + $0x20] sm:$0xf]
      %v284 = vld [vmem:[%s248 + $0x24] sm:$0xf]
      %v285 = vld [vmem:[%s248 + $0x28] sm:$0xf]
      %v286 = vld [vmem:[%s248 + $0x2c] sm:$0xf]
      %v287 = vld [vmem:[%s248 + $0x30] sm:$0xf]
      %v288 = vld [vmem:[%s248 + $0x34] sm:$0xf]
      %v289 = vld [vmem:[%s248 + $0x38] sm:$0xf]
      %v290 = vld [vmem:[%s248 + $0x3c] sm:$0xf]
      %v291 = vld [vmem:[%s1] sm:$0xf]
      %v292 = vld [vmem:[%s1 + $0x4] sm:$0xf]
      %v293 = vld [vmem:[%s1 + $0x8] sm:$0xf]
      %v294 = vld [vmem:[%s1 + $0xc] sm:$0xf]
      %v295 = vld [vmem:[%s1 + $0x10] sm:$0x3]
      %v312 = vunpack.c.l.b16 %v275
      %v313 = vunpack.c.l.b16 %v276
      %v314 = vunpack.c.l.b16 %v277
      %v315 = vunpack.c.l.b16 %v278
      %v316 = vunpack.c.l.b16 %v279
      %v317 = vunpack.c.l.b16 %v280
      %v318 = vunpack.c.l.b16 %v281
      %v319 = vunpack.c.l.b16 %v282
      %v320 = vunpack.c.l.b16 %v283
      %v321 = vunpack.c.l.b16 %v284
      %v322 = vunpack.c.l.b16 %v285
      %v323 = vunpack.c.l.b16 %v286
      %v324 = vunpack.c.l.b16 %v287
      %v325 = vunpack.c.l.b16 %v288
      %v326 = vunpack.c.l.b16 %v289
      %v327 = vunpack.c.l.b16 %v290
      %v328 = vpack.c.b16 %v313, %v312
      %v329 = vpack.c.b16 %v315, %v314
      %v330 = vpack.c.b16 %v317, %v316
      %v331 = vpack.c.b16 %v319, %v318
      %v332 = vpack.c.b16 %v321, %v320
      %v333 = vpack.c.b16 %v323, %v322
      %v334 = vpack.c.b16 %v325, %v324
      %v335 = vpack.c.b16 %v327, %v326
      %v341 = vunpack.c.l.b16 %v291
      %v342 = vunpack.c.l.b16 %v292
      %v343 = vunpack.c.l.b16 %v293
      %v344 = vunpack.c.l.b16 %v294
      %v345 = vunpack.c.l.b16 %v295
      %v346 = vpack.c.b16 %v342, %v341
      %v347 = vpack.c.b16 %v344, %v343
      %v348 = vpack.c.b16 %v345, %v345
      %vm351 = vcmask 293888
      %v353 = vsel %vm351, %v328, 0
      %v356 = vsel %vm351, %v329, 0
      %v359 = vsel %vm351, %v330, 0
      %v362 = vsel %vm351, %v331, 0
      %v365 = vsel %vm351, %v332, 0
      %v368 = vsel %vm351, %v333, 0
      %v371 = vsel %vm351, %v334, 0
      %v374 = vsel %vm351, %v335, 0
      %vm376 = vcmask 1041408
      %v378 = vsel %vm376, %v348, 0
      %380 = vmatprep.subr.bf16.mxu0 0
      %381 = vmatpush1.bf16.msra.mxu0 0
      %382 = vmatprep.subr.bf16.mxu0 0
      %383 = vmatpush1.bf16.msra.mxu0 0
      %384 = vmatprep.subr.bf16.mxu0 0
      %385 = vmatpush1.bf16.msra.mxu0 0
      %386 = vmatprep.subr.bf16.mxu0 0
      %387 = vmatpush1.bf16.msra.mxu0 0
      %388 = vmatprep.subr.bf16.mxu0 0
      %389 = vmatpush1.bf16.msra.mxu0 0
      %390 = vmatprep.subr.bf16.mxu0 0
      %391 = vmatpush1.bf16.msra.mxu0 %v378
      %392 = vmatprep.subr.bf16.mxu0 0
      %393 = vmatpush1.bf16.msra.mxu0 %v347
      %394 = vmatprep.subr.bf16.mxu0 0
      %395 = vmatpush1.bf16.msra.mxu0 %v346
      %396 = vmatprep.subr.bf16.mxu0 0
      %397 = vmatpush2.bf16.msra.mxu0 0
      %398 = vmatprep.subr.bf16.mxu0 0
      %399 = vmatpush2.bf16.msra.mxu0 0
      %400 = vmatprep.subr.bf16.mxu0 0
      %401 = vmatpush2.bf16.msra.mxu0 0
      %402 = vmatprep.subr.bf16.mxu0 0
      %403 = vmatpush2.bf16.msra.mxu0 0
      %404 = vmatprep.subr.bf16.mxu0 0
      %405 = vmatpush2.bf16.msra.mxu0 0
      %406 = vmatprep.subr.bf16.mxu0 0
      %407 = vmatpush2.bf16.msra.mxu0 0
      %408 = vmatprep.subr.bf16.mxu0 0
      %409 = vmatpush2.bf16.msra.mxu0 0
      %410 = vmatprep.subr.bf16.mxu0 0
      %411 = vmatpush2.bf16.msra.mxu0 0
      %412 = vmatprep.mubr.bf16.mxu0 0
      %413 = vmatmul.mubr.bf16.gmra.mxu0 %v353
      %v414 = vpop.f32.mrf.mxu0
      %v415 = vadd.f32 0.0, %v414
      %v416 = vpop.f32.mrf.mxu0
      %v417 = vpop.f32.mrf.mxu0
      %v418 = vadd.f32 0.0, %v417
      %v419 = vpop.f32.mrf.mxu0
      %420 = vmatprep.mubr.bf16.mxu0 0
      %421 = vmatmul.mubr.bf16.gmra.mxu0 %v356
      %v422 = vpop.f32.mrf.mxu0
      %v423 = vadd.f32 0.0, %v422
      %v424 = vpop.f32.mrf.mxu0
      %v425 = vpop.f32.mrf.mxu0
      %v426 = vadd.f32 0.0, %v425
      %v427 = vpop.f32.mrf.mxu0
      %428 = vmatprep.mubr.bf16.mxu0 0
      %429 = vmatmul.mubr.bf16.gmra.mxu0 %v359
      %v430 = vpop.f32.mrf.mxu0
      %v431 = vadd.f32 0.0, %v430
      %v432 = vpop.f32.mrf.mxu0
      %v433 = vpop.f32.mrf.mxu0
      %v434 = vadd.f32 0.0, %v433
      %v435 = vpop.f32.mrf.mxu0
      %436 = vmatprep.mubr.bf16.mxu0 0
      %437 = vmatmul.mubr.bf16.gmra.mxu0 %v362
      %v438 = vpop.f32.mrf.mxu0
      %v439 = vadd.f32 0.0, %v438
      %v440 = vpop.f32.mrf.mxu0
      %v441 = vpop.f32.mrf.mxu0
      %v442 = vadd.f32 0.0, %v441
      %v443 = vpop.f32.mrf.mxu0
      %444 = vmatprep.mubr.bf16.mxu0 0
      %445 = vmatmul.mubr.bf16.gmra.mxu0 %v365
      %v446 = vpop.f32.mrf.mxu0
      %v447 = vadd.f32 0.0, %v446
      %v448 = vpop.f32.mrf.mxu0
      %v449 = vpop.f32.mrf.mxu0
      %v450 = vadd.f32 0.0, %v449
      %v451 = vpop.f32.mrf.mxu0
      %452 = vmatprep.mubr.bf16.mxu0 0
      %453 = vmatmul.mubr.bf16.gmra.mxu0 %v368
      %v454 = vpop.f32.mrf.mxu0
      %v455 = vadd.f32 0.0, %v454
      %v456 = vpop.f32.mrf.mxu0
      %v457 = vpop.f32.mrf.mxu0
      %v458 = vadd.f32 0.0, %v457
      %v459 = vpop.f32.mrf.mxu0
      %460 = vmatprep.mubr.bf16.mxu0 0
      %461 = vmatmul.mubr.bf16.gmra.mxu0 %v371
      %v462 = vpop.f32.mrf.mxu0
      %v463 = vadd.f32 0.0, %v462
      %v464 = vpop.f32.mrf.mxu0
      %v465 = vpop.f32.mrf.mxu0
      %v466 = vadd.f32 0.0, %v465
      %v467 = vpop.f32.mrf.mxu0
      %468 = vmatprep.mubr.bf16.mxu0 0
      %469 = vmatmul.mubr.bf16.gmra.mxu0 %v374
      %v470 = vpop.f32.mrf.mxu0
      %v471 = vadd.f32 0.0, %v470
      %v472 = vpop.f32.mrf.mxu0
      %v473 = vpop.f32.mrf.mxu0
      %v474 = vadd.f32 0.0, %v473
      %v475 = vpop.f32.mrf.mxu0
      %476 = vdwg.mxu0
      %v477 = vpack.c.bf16 %v418, %v415
      %v478 = vpack.c.bf16 %v426, %v423
      %v479 = vpack.c.bf16 %v434, %v431
      %v480 = vpack.c.bf16 %v442, %v439
      %v481 = vpack.c.bf16 %v450, %v447
      %v482 = vpack.c.bf16 %v458, %v455
      %v483 = vpack.c.bf16 %v466, %v463
      %v484 = vpack.c.bf16 %v474, %v471
      %v493 = vunpack.c.l.b16 %v477
      %v494 = vunpack.c.h.b16 %v477
      %v495 = vunpack.c.l.b16 %v478
      %v496 = vunpack.c.h.b16 %v478
      %v497 = vunpack.c.l.b16 %v479
      %v498 = vunpack.c.h.b16 %v479
      %v499 = vunpack.c.l.b16 %v480
      %v500 = vunpack.c.h.b16 %v480
      %v501 = vunpack.c.l.b16 %v481
      %v502 = vunpack.c.h.b16 %v481
      %v503 = vunpack.c.l.b16 %v482
      %v504 = vunpack.c.h.b16 %v482
      %v505 = vunpack.c.l.b16 %v483
      %v506 = vunpack.c.h.b16 %v483
      %v507 = vunpack.c.l.b16 %v484
      %v508 = vunpack.c.h.b16 %v484
      %v509 = vpack.c.b16 %v493, %v493
      %v510 = vpack.c.b16 %v494, %v494
      %v511 = vpack.c.b16 %v495, %v495
      %v512 = vpack.c.b16 %v496, %v496
      %v513 = vpack.c.b16 %v497, %v497
      %v514 = vpack.c.b16 %v498, %v498
      %v515 = vpack.c.b16 %v499, %v499
      %v516 = vpack.c.b16 %v500, %v500
      %v517 = vpack.c.b16 %v501, %v501
      %v518 = vpack.c.b16 %v502, %v502
      %v519 = vpack.c.b16 %v503, %v503
      %v520 = vpack.c.b16 %v504, %v504
      %v521 = vpack.c.b16 %v505, %v505
      %v522 = vpack.c.b16 %v506, %v506
      %v523 = vpack.c.b16 %v507, %v507
      %v524 = vpack.c.b16 %v508, %v508
      %541 = vst [vmem:[%s258] sm:$0xf] %v509
      %542 = vst [vmem:[%s258 + $0x4] sm:$0xf] %v510
      %543 = vst [vmem:[%s258 + $0x8] sm:$0xf] %v511
      %544 = vst [vmem:[%s258 + $0xc] sm:$0xf] %v512
      %545 = vst [vmem:[%s258 + $0x10] sm:$0xf] %v513
      %546 = vst [vmem:[%s258 + $0x14] sm:$0xf] %v514
      %547 = vst [vmem:[%s258 + $0x18] sm:$0xf] %v515
      %548 = vst [vmem:[%s258 + $0x1c] sm:$0xf] %v516
      %549 = vst [vmem:[%s258 + $0x20] sm:$0xf] %v517
      %550 = vst [vmem:[%s258 + $0x24] sm:$0xf] %v518
      %551 = vst [vmem:[%s258 + $0x28] sm:$0xf] %v519
      %552 = vst [vmem:[%s258 + $0x2c] sm:$0xf] %v520
      %553 = vst [vmem:[%s258 + $0x30] sm:$0xf] %v521
      %554 = vst [vmem:[%s258 + $0x34] sm:$0xf] %v522
      %555 = vst [vmem:[%s258 + $0x38] sm:$0xf] %v523
      %556 = vst [vmem:[%s258 + $0x3c] sm:$0xf] %v524
      %s557 = smul.u32 %s21, 128
      %s558 = ssub.s32 256, %s557
      %p559 = scmp.lt.s32.totalorder %s558, 128
      %s560 = scalar_select %p559, %s558, 128
      %v561 = vadd.f32 %v415, %v418
      %v562 = vadd.f32 %v561, %v423
      %v563 = vadd.f32 %v562, %v426
      %v564 = vadd.f32 %v563, %v431
      %v565 = vadd.f32 %v564, %v434
      %v566 = vadd.f32 %v565, %v439
      %v567 = vadd.f32 %v566, %v442
      %v568 = vadd.f32 %v567, %v447
      %v569 = vadd.f32 %v568, %v450
      %v570 = vadd.f32 %v569, %v455
      %v571 = vadd.f32 %v570, %v458
      %v572 = vadd.f32 %v571, %v463
      %v573 = vadd.f32 %v572, %v466
      %v574 = vadd.f32 %v573, %v471
      %v575 = vadd.f32 %v574, %v474
      %v576 = vrot.slane %v575, 4
      %v577 = vadd.f32 %v575, %v576
      %v578 = vrot.slane %v577, 2
      %v579 = vadd.f32 %v577, %v578
      %v580 = vrot.slane %v579, 1
      %v581 = vadd.f32 %v579, %v580
      %s582 = scvt.s32.f32 %s560
      %v583 = vstv %s582
      %v584 = vrcp.pop %v583
      %v585 = vmul.f32 %v581, %v584
      %v586 = vlaneseq
      %v587 = vshrl.u32 %v586, 7
      %v588 = vadd.s32 %v587, 8
      %v589 = vadd.s32 %v587, 16
      %v590 = vadd.s32 %v587, 24
      %v591 = vadd.s32 %v587, 32
      %v592 = vadd.s32 %v587, 40
      %v593 = vadd.s32 %v587, 48
      %v594 = vadd.s32 %v587, 56
      %v595 = vadd.s32 %v587, 64
      %v596 = vadd.s32 %v587, 72
      %v597 = vadd.s32 %v587, 80
      %v598 = vadd.s32 %v587, 88
      %v599 = vadd.s32 %v587, 96
      %v600 = vadd.s32 %v587, 104
      %v601 = vadd.s32 %v587, 112
      %v602 = vadd.s32 %v587, 120
      %v603 = vstv %s560
      %vm604 = vcmp.lt.s32.totalorder %v587, %v603
      %vm605 = vcmp.lt.s32.totalorder %v588, %v603
      %vm606 = vcmp.lt.s32.totalorder %v589, %v603
      %vm607 = vcmp.lt.s32.totalorder %v590, %v603
      %vm608 = vcmp.lt.s32.totalorder %v591, %v603
      %vm609 = vcmp.lt.s32.totalorder %v592, %v603
      %vm610 = vcmp.lt.s32.totalorder %v593, %v603
      %vm611 = vcmp.lt.s32.totalorder %v594, %v603
      %vm612 = vcmp.lt.s32.totalorder %v595, %v603
      %vm613 = vcmp.lt.s32.totalorder %v596, %v603
      %vm614 = vcmp.lt.s32.totalorder %v597, %v603
      %vm615 = vcmp.lt.s32.totalorder %v598, %v603
      %vm616 = vcmp.lt.s32.totalorder %v599, %v603
      %vm617 = vcmp.lt.s32.totalorder %v600, %v603
      %vm618 = vcmp.lt.s32.totalorder %v601, %v603
      %vm619 = vcmp.lt.s32.totalorder %v602, %v603
      %v620 = vsub.f32 %v415, %v585
      %v621 = vsub.f32 %v418, %v585
      %v622 = vsub.f32 %v423, %v585
      %v623 = vsub.f32 %v426, %v585
      %v624 = vsub.f32 %v431, %v585
      %v625 = vsub.f32 %v434, %v585
      %v626 = vsub.f32 %v439, %v585
      %v627 = vsub.f32 %v442, %v585
      %v628 = vsub.f32 %v447, %v585
      %v629 = vsub.f32 %v450, %v585
      %v630 = vsub.f32 %v455, %v585
      %v631 = vsub.f32 %v458, %v585
      %v632 = vsub.f32 %v463, %v585
      %v633 = vsub.f32 %v466, %v585
      %v634 = vsub.f32 %v471, %v585
      %v635 = vsub.f32 %v474, %v585
      %v636 = vsel %vm604, 1, 0
      %v637 = vsel %vm605, 1, 0
      %v638 = vsel %vm606, 1, 0
      %v639 = vsel %vm607, 1, 0
      %v640 = vsel %vm608, 1, 0
      %v641 = vsel %vm609, 1, 0
      %v642 = vsel %vm610, 1, 0
      %v643 = vsel %vm611, 1, 0
      %v644 = vsel %vm612, 1, 0
      %v645 = vsel %vm613, 1, 0
      %v646 = vsel %vm614, 1, 0
      %v647 = vsel %vm615, 1, 0
      %v648 = vsel %vm616, 1, 0
      %v649 = vsel %vm617, 1, 0
      %v650 = vsel %vm618, 1, 0
      %v651 = vsel %vm619, 1, 0
      %vm652 = vcmp.eq.s32.totalorder %v636, 1
      %vm653 = vcmp.eq.s32.totalorder %v637, 1
      %vm654 = vcmp.eq.s32.totalorder %v638, 1
      %vm655 = vcmp.eq.s32.totalorder %v639, 1
      %vm656 = vcmp.eq.s32.totalorder %v640, 1
      %vm657 = vcmp.eq.s32.totalorder %v641, 1
      %vm658 = vcmp.eq.s32.totalorder %v642, 1
      %vm659 = vcmp.eq.s32.totalorder %v643, 1
      %vm660 = vcmp.eq.s32.totalorder %v644, 1
      %vm661 = vcmp.eq.s32.totalorder %v645, 1
      %vm662 = vcmp.eq.s32.totalorder %v646, 1
      %vm663 = vcmp.eq.s32.totalorder %v647, 1
      %vm664 = vcmp.eq.s32.totalorder %v648, 1
      %vm665 = vcmp.eq.s32.totalorder %v649, 1
      %vm666 = vcmp.eq.s32.totalorder %v650, 1
      %vm667 = vcmp.eq.s32.totalorder %v651, 1
      %v668 = vsel %vm652, %v620, 0.0
      %v669 = vsel %vm653, %v621, 0.0
      %v670 = vsel %vm654, %v622, 0.0
      %v671 = vsel %vm655, %v623, 0.0
      %v672 = vsel %vm656, %v624, 0.0
      %v673 = vsel %vm657, %v625, 0.0
      %v674 = vsel %vm658, %v626, 0.0
      %v675 = vsel %vm659, %v627, 0.0
      %v676 = vsel %vm660, %v628, 0.0
      %v677 = vsel %vm661, %v629, 0.0
      %v678 = vsel %vm662, %v630, 0.0
      %v679 = vsel %vm663, %v631, 0.0
      %v680 = vsel %vm664, %v632, 0.0
      %v681 = vsel %vm665, %v633, 0.0
      %v682 = vsel %vm666, %v634, 0.0
      %v683 = vsel %vm667, %v635, 0.0
      %684 = vst [vmem:[%s264] sm:$0x1] %v581
      %v685 = vmul.f32 %v668, %v668
      %v686 = vmul.f32 %v669, %v669
      %v687 = vmul.f32 %v670, %v670
      %v688 = vmul.f32 %v671, %v671
      %v689 = vmul.f32 %v672, %v672
      %v690 = vmul.f32 %v673, %v673
      %v691 = vmul.f32 %v674, %v674
      %v692 = vmul.f32 %v675, %v675
      %v693 = vmul.f32 %v676, %v676
      %v694 = vmul.f32 %v677, %v677
      %v695 = vmul.f32 %v678, %v678
      %v696 = vmul.f32 %v679, %v679
      %v697 = vmul.f32 %v680, %v680
      %v698 = vmul.f32 %v681, %v681
      %v699 = vmul.f32 %v682, %v682
      %v700 = vmul.f32 %v683, %v683
      %v701 = vadd.f32 %v685, %v686
      %v702 = vadd.f32 %v701, %v687
      %v703 = vadd.f32 %v702, %v688
      %v704 = vadd.f32 %v703, %v689
      %v705 = vadd.f32 %v704, %v690
      %v706 = vadd.f32 %v705, %v691
      %v707 = vadd.f32 %v706, %v692
      %v708 = vadd.f32 %v707, %v693
      %v709 = vadd.f32 %v708, %v694
      %v710 = vadd.f32 %v709, %v695
      %v711 = vadd.f32 %v710, %v696
      %v712 = vadd.f32 %v711, %v697
      %v713 = vadd.f32 %v712, %v698
      %v714 = vadd.f32 %v713, %v699
      %v715 = vadd.f32 %v714, %v700
      %v716 = vrot.slane %v715, 4
      %v717 = vadd.f32 %v715, %v716
      %v718 = vrot.slane %v717, 2
      %v719 = vadd.f32 %v717, %v718
      %v720 = vrot.slane %v719, 1
      %v721 = vadd.f32 %v719, %v720
      %722 = vst [vmem:[%s271] sm:$0x1] %v721
      %s723 = smul.u32 16, %s21
      %p724 = scmp.lt.s32.totalorder %s20, 1
      %s725 = scalar_select %p724, %s20, 1
      %p726 = scmp.lt.s32.totalorder %s723, 31
      %s727 = scalar_select %p726, %s723, 31
      %s728 = smul.addr %s725, 32
      %s729 = sadd.s32 %s727, %s728
      %s730 = smul.addr %s729, 4
      %s731 = scalar_lea.vmem %s2, %s730
      %s732 = smul.u32 %s20, 2
      %s733 = sadd.s32 %s732, %s21
      %p734 = scmp.lt.s32.totalorder %s733, 3
      %s735 = scalar_select %p734, %s733, 3
      %s736 = scalar_lea.vmem %s3, %s735
      %s737 = smul.u32 %s20, 2
      %s738 = sadd.s32 %s737, %s21
      %p739 = scmp.lt.s32.totalorder %s738, 3
      %s740 = scalar_select %p739, %s738, 3
      %s741 = scalar_lea.vmem %s4, %s740
      // Predicated region
      $region29: #{discriminator_block.2} parent=27 // pred_check
        %p742 = pneg %p97
      $region30: #{discriminator_block.2} parent=27 // pred_check_branch
        %744 = sbr.rel (%p742) target = $region32
      $region31: #{discriminator_block.2} parent=27 // pred_region
        %s745 = smul.u32 16, %s21
      $region32: #{discriminator_block.2} parent=27 // pred_fallthru
        _
      // Predicated region
      $region33: #{discriminator_block.2} parent=27 // pred_check
        %p746 = pneg %p127
      $region34: #{discriminator_block.2} parent=27 // pred_check_branch
        %748 = sbr.rel (%p746) target = $region36
      $region35: #{discriminator_block.2} parent=27 // pred_region
        %s749 = smul.u32 %s20, 2
        %s750 = sadd.s32 %s749, %s21
      $region36: #{discriminator_block.2} parent=27 // pred_fallthru
        _
      // Predicated region
      $region37: #{discriminator_block.2} parent=27 // pred_check
        %p751 = pneg %p157
      $region38: #{discriminator_block.2} parent=27 // pred_check_branch
        %753 = sbr.rel (%p751) target = $region40
      $region39: #{discriminator_block.2} parent=27 // pred_region
        %s754 = smul.u32 %s20, 2
        %s755 = sadd.s32 %s754, %s21
      $region40: #{discriminator_block.2} parent=27 // pred_fallthru
        _
    $region28: #{discriminator_block.2} parent=5 // pred_fallthru
      _
    %p756 = scmp.le.s32.totalorder 2, %s11
    // Predicated region
    $region41: #{discriminator_block.2} parent=5 // pred_check
      %p757 = pneg %p756
    $region42: #{discriminator_block.2} parent=5 // pred_check_branch
      %759 = sbr.rel (%p757) target = $region44
    $region43: #{discriminator_block.2} parent=5 // pred_region
      %s760 = ssub.s32 %s11, 2
      // Predicated region
      $region45: #{discriminator_block.2} parent=43 // pred_check
        %p761 = pneg %p103
      $region46: #{discriminator_block.2} parent=43 // pred_check_branch
        %763 = sbr.rel (%p761) target = $region48
      $region47: #{discriminator_block.2} parent=43 // pred_region
        %s764 = smul.u32 16, %s23
        %p765 = scmp.lt.s32.totalorder %s22, 1
        %s766 = scalar_select %p765, %s22, 1
        %p767 = scmp.lt.s32.totalorder %s764, 31
        %s768 = scalar_select %p767, %s764, 31
        %s769 = smul.addr %s766, 32
        %s770 = sadd.s32 %s768, %s769
        %s771 = smul.addr %s770, 4
        %s772 = scalar_lea.vmem %s2, %s771
      $region48: #{discriminator_block.2} parent=43 // pred_fallthru
        _
      // Predicated region
      $region49: #{discriminator_block.2} parent=43 // pred_check
        %p773 = pneg %p133
      $region50: #{discriminator_block.2} parent=43 // pred_check_branch
        %775 = sbr.rel (%p773) target = $region52
      $region51: #{discriminator_block.2} parent=43 // pred_region
        %s776 = smul.u32 %s22, 2
        %s777 = sadd.s32 %s776, %s23
        %p778 = scmp.lt.s32.totalorder %s777, 3
        %s779 = scalar_select %p778, %s777, 3
        %s780 = scalar_lea.vmem %s3, %s779
      $region52: #{discriminator_block.2} parent=43 // pred_fallthru
        _
      // Predicated region
      $region53: #{discriminator_block.2} parent=43 // pred_check
        %p781 = pneg %p163
      $region54: #{discriminator_block.2} parent=43 // pred_check_branch
        %783 = sbr.rel (%p781) target = $region56
      $region55: #{discriminator_block.2} parent=43 // pred_region
        %s784 = smul.u32 %s22, 2
        %s785 = sadd.s32 %s784, %s23
        %p786 = scmp.lt.s32.totalorder %s785, 3
        %s787 = scalar_select %p786, %s785, 3
        %s788 = scalar_lea.vmem %s4, %s787
      $region56: #{discriminator_block.2} parent=43 // pred_fallthru
        _
    $region44: #{discriminator_block.2} parent=5 // pred_fallthru
      _
  $region6: #{discriminator_block.2} parent=0 // loop_footer
    %s15 = sadd.s32 1, %s11
  $region7: #{discriminator_block.2} parent=0 // loop_footer_branch
    %10 = sbr.rel target = $region3
  $region8: #{discriminator_block.2} parent=0 // loop_exit
    _

</llo_original>
